<compile_context>
chip_gen: v6e
topology: v6e:2x2x1
jax: 0.10.0
libtpu: 0.0.40
codegen_flags: <defaults>
</compile_context>

<pallas_src>
import functools

import jax
import jax.numpy as jnp
from jax.experimental import pallas as pl
from jax.experimental.pallas import tpu as pltpu


def _attention_kernel(x_ref, wqkv_ref, wproj_ref, bproj_ref, o_ref,
                      k_scratch, v_scratch, *, num_heads, scale, tile_n):
    # x_ref:     (1, N, C)   full sequence for the current batch element
    # wqkv_ref:  (C, 3C)     qkv weight (in, out)
    # wproj_ref: (C, C)      proj weight (in, out)
    # bproj_ref: (1, C)      proj bias
    # o_ref:     (1, tile_n, C)
    # k_scratch / v_scratch: (H, N, Dh) head-major K / V, persist across q tiles
    qi = pl.program_id(1)
    N = x_ref.shape[1]
    C = x_ref.shape[2]
    H = num_heads
    Dh = C // H

    # ---- once per batch element: project K, V for the whole sequence -------
    @pl.when(qi == 0)
    def _():
        xb = x_ref[0]                                              # (N, C) native dtype
        k_nc = jnp.dot(xb, wqkv_ref[:, C:2 * C],
                       preferred_element_type=jnp.float32)         # (N, C) f32
        v_nc = jnp.dot(xb, wqkv_ref[:, 2 * C:3 * C],
                       preferred_element_type=jnp.float32)         # (N, C) f32
        for h in range(H):
            k_scratch[h] = k_nc[:, h * Dh:(h + 1) * Dh].astype(k_scratch.dtype)
            v_scratch[h] = v_nc[:, h * Dh:(h + 1) * Dh].astype(v_scratch.dtype)

    # ---- per query tile -----------------------------------------------------
    start = pl.multiple_of(qi * tile_n, tile_n)
    xq = x_ref[0, pl.ds(start, tile_n), :]                          # (tile_n, C)
    # Fold the attention scale into q (cheaper than scaling the score matrix).
    q = jnp.dot(xq, wqkv_ref[:, 0:C],
                preferred_element_type=jnp.float32) * scale         # (tile_n, C) f32
    q = q.astype(k_scratch.dtype)                                   # native dtype for MXU

    acc = jnp.zeros((tile_n, C), dtype=jnp.float32)
    for h in range(H):
        q_h = q[:, h * Dh:(h + 1) * Dh]                             # (tile_n, Dh)
        s = jnp.dot(q_h, k_scratch[h].T,
                    preferred_element_type=jnp.float32)             # (tile_n, N) f32
        m = jnp.max(s, axis=-1, keepdims=True)
        p = jnp.exp(s - m)
        p = p * pl.reciprocal(jnp.sum(p, axis=-1, keepdims=True), approx=True)
        # attn_drop is Dropout(0.0) -> identity
        pv = jnp.dot(p.astype(v_scratch.dtype), v_scratch[h],
                     preferred_element_type=jnp.float32)            # (tile_n, Dh)
        # Fused output projection: rank-Dh update with the matching W_proj rows.
        acc = acc + jnp.dot(pv.astype(wproj_ref.dtype),
                            wproj_ref[h * Dh:(h + 1) * Dh, :],
                            preferred_element_type=jnp.float32)     # (tile_n, C)

    out = acc + bproj_ref[...].astype(jnp.float32)
    # proj_drop is Dropout(0.0) -> identity
    o_ref[0] = out.astype(o_ref.dtype)


def _pick_tile_n(n):
    for t in (512, 448, 384, 256, 128, 64, 32, 16, 8):
        if n % t == 0:
            return t
    return n  # fall back to a single full-sequence tile


def attention_forward(x, w_qkv, w_proj, b_proj, *, num_heads,
                      tile_n=None, vmem_limit_bytes=48 * 1024 * 1024):
    """x: (B, N, C); w_qkv: (C, 3C); w_proj: (C, C); b_proj: (1, C)."""
    B, N, C = x.shape
    assert C % num_heads == 0
    Dh = C // num_heads
    scale = Dh ** (-0.5)
    if tile_n is None:
        tile_n = _pick_tile_n(N)
    assert N % tile_n == 0
    nq = N // tile_n

    kernel = functools.partial(_attention_kernel, num_heads=num_heads,
                               scale=scale, tile_n=tile_n)

    return pl.pallas_call(
        kernel,
        out_shape=jax.ShapeDtypeStruct((B, N, C), x.dtype),
        grid_spec=pltpu.PrefetchScalarGridSpec(
            num_scalar_prefetch=0,
            grid=(B, nq),
            in_specs=[
                # Full-sequence x block: index_map is constant over the q-tile
                # axis, so it is only re-DMA'd when b changes; query tiles are
                # sliced in-kernel with pl.ds.
                pl.BlockSpec((1, N, C), lambda b, q: (b, 0, 0)),
                # Constant weight / bias blocks (fetched once).
                # TODO(synk): consider pipeline_mode=pl.Buffered(1) for these on VMEM-tight v7x.
                pl.BlockSpec((C, 3 * C), lambda b, q: (0, 0)),
                pl.BlockSpec((C, C), lambda b, q: (0, 0)),
                pl.BlockSpec((1, C), lambda b, q: (0, 0)),
            ],
            out_specs=pl.BlockSpec((1, tile_n, C), lambda b, q: (b, q, 0)),
            scratch_shapes=[
                pltpu.VMEM((num_heads, N, Dh), x.dtype),   # K, head-major
                pltpu.VMEM((num_heads, N, Dh), x.dtype),   # V, head-major
            ],
        ),
        compiler_params=pltpu.CompilerParams(
            dimension_semantics=("parallel", "arbitrary"),
            vmem_limit_bytes=vmem_limit_bytes),
    )(x, w_qkv, w_proj, b_proj)


def attention_reference(x, w_qkv, w_proj, b_proj, *, num_heads):
    """Pure-JAX reference mirroring the PyTorch forward exactly."""
    B, N, C = x.shape
    H = num_heads
    Dh = C // H
    scale = Dh ** (-0.5)
    qkv = x @ w_qkv                                          # (B, N, 3C)
    qkv = qkv.reshape(B, N, 3, H, Dh).transpose(2, 0, 3, 1, 4)
    q, k, v = qkv[0], qkv[1], qkv[2]                         # (B, H, N, Dh)
    attn = jnp.einsum("bhnd,bhmd->bhnm", q, k) * scale
    attn = jax.nn.softmax(attn, axis=-1)
    out = jnp.einsum("bhnm,bhmd->bhnd", attn, v)             # (B, H, N, Dh)
    out = out.transpose(0, 2, 1, 3).reshape(B, N, C)
    return out @ w_proj + b_proj


def _run_case(key, B, N, C, H, tile_n=None):
    kx, kqkv, kproj, kb = jax.random.split(key, 4)
    x = jax.random.normal(kx, (B, N, C), dtype=jnp.float32)
    w_qkv = jax.random.normal(kqkv, (C, 3 * C), dtype=jnp.float32) * 0.05
    w_proj = jax.random.normal(kproj, (C, C), dtype=jnp.float32) * 0.05
    b_proj = jax.random.normal(kb, (1, C), dtype=jnp.float32) * 0.01

    y = attention_forward(x, w_qkv, w_proj, b_proj, num_heads=H, tile_n=tile_n)
    y = jax.block_until_ready(y)

    y_ref = attention_reference(x, w_qkv, w_proj, b_proj, num_heads=H)
    assert y.shape == (B, N, C)
    err = float(jnp.max(jnp.abs(y - y_ref)))
    # approx reciprocal in the softmax denominator -> slightly relaxed tolerance
    assert jnp.allclose(y, y_ref, rtol=2e-3, atol=2e-3), f"mismatch vs reference (max err {err})"


if __name__ == "__main__":
    key = jax.random.PRNGKey(0)
    k1, k2 = jax.random.split(key)

    # Small shape consistent with the module: dim=32, 4 heads (head_dim=8).
    _run_case(k1, B=2, N=8, C=32, H=4)
    # Slightly larger case that exercises multiple query tiles per batch
    # element (scratch K/V carried across the inner grid axis).
    _run_case(k2, B=2, N=256, C=128, H=4, tile_n=128)

    print("KERNEL_OK")
</pallas_src>

<mosaic_0001>
module attributes {stable_mosaic.version = 11 : i64} {
  func.func @_attention_kernel(%arg0: i32, %arg1: i32, %arg2: memref<1x8x32xf32, #tpu.memory_space<vmem>>, %arg3: memref<32x96xf32, #tpu.memory_space<vmem>>, %arg4: memref<32x32xf32, #tpu.memory_space<vmem>>, %arg5: memref<1x32xf32, #tpu.memory_space<vmem>>, %arg6: memref<1x8x32xf32, #tpu.memory_space<vmem>>, %arg7: memref<4x8x8xf32, #tpu.memory_space<vmem>>, %arg8: memref<4x8x8xf32, #tpu.memory_space<vmem>>) attributes {dimension_semantics = [#tpu.dimension_semantics<parallel>, #tpu.dimension_semantics<arbitrary>], iteration_bounds = array<i64: 2, 1>, scalar_prefetch = 0 : i64, scratch_operands = 2 : i64, tpu.core_type = #tpu.core_type<tc>, window_params = [{transform_indices = @transform_0, window_bounds = array<i64: 1, 8, 32>}, {pipeline_mode = #tpu.pipeline_mode<synchronous>, transform_indices = @transform_1, window_bounds = array<i64: 32, 96>}, {pipeline_mode = #tpu.pipeline_mode<synchronous>, transform_indices = @transform_2, window_bounds = array<i64: 32, 32>}, {pipeline_mode = #tpu.pipeline_mode<synchronous>, transform_indices = @transform_3, window_bounds = array<i64: 1, 32>}, {transform_indices = @transform_4, window_bounds = array<i64: 1, 8, 32>}]} {
    %c0_i32 = arith.constant 0 : i32
    %0 = arith.cmpi eq, %arg1, %c0_i32 : i32
    %1 = arith.extui %0 : i1 to i32
    %c0_i32_0 = arith.constant 0 : i32
    %2 = arith.cmpi ne, %1, %c0_i32_0 : i32
    scf.if %2 {
      %c0_57 = arith.constant 0 : index
      %c0_58 = arith.constant 0 : index
      %c0_59 = arith.constant 0 : index
      %103 = vector.load %arg2[%c0_57, %c0_58, %c0_59] : memref<1x8x32xf32, #tpu.memory_space<vmem>>, vector<1x8x32xf32>
      %104 = vector.shape_cast %103 : vector<1x8x32xf32> to vector<8x32xf32>
      %c0_60 = arith.constant 0 : index
      %c32 = arith.constant 32 : index
      %105 = vector.load %arg3[%c0_60, %c32] : memref<32x96xf32, #tpu.memory_space<vmem>>, vector<32x32xf32>
      %cst_61 = arith.constant dense<0.000000e+00> : vector<8x32xf32>
      %106 = tpu.matmul %104, %105, %cst_61 {dimension_numbers = #tpu.dot_dimension_numbers<[1], [0], [0], [1], [0, 0, 1, 1], [], []>} : vector<8x32xf32>, vector<32x32xf32>, vector<8x32xf32> -> vector<8x32xf32>
      %c0_62 = arith.constant 0 : index
      %c64 = arith.constant 64 : index
      %107 = vector.load %arg3[%c0_62, %c64] : memref<32x96xf32, #tpu.memory_space<vmem>>, vector<32x32xf32>
      %cst_63 = arith.constant dense<0.000000e+00> : vector<8x32xf32>
      %108 = tpu.matmul %104, %107, %cst_63 {dimension_numbers = #tpu.dot_dimension_numbers<[1], [0], [0], [1], [0, 0, 1, 1], [], []>} : vector<8x32xf32>, vector<32x32xf32>, vector<8x32xf32> -> vector<8x32xf32>
      %109 = vector.extract_strided_slice %106 {offsets = [0, 0], sizes = [8, 8], strides = [1, 1]} : vector<8x32xf32> to vector<8x8xf32>
      %c0_64 = arith.constant 0 : index
      %c0_65 = arith.constant 0 : index
      %c0_66 = arith.constant 0 : index
      %110 = vector.load %arg7[%c0_64, %c0_65, %c0_66] : memref<4x8x8xf32, #tpu.memory_space<vmem>>, vector<1x8x8xf32>
      %111 = vector.shape_cast %110 : vector<1x8x8xf32> to vector<8x8xf32>
      %112 = vector.shape_cast %109 : vector<8x8xf32> to vector<1x8x8xf32>
      tpu.vector_store %arg7[%c0_64, %c0_65, %c0_66], %112 {strides = array<i32>} : memref<4x8x8xf32, #tpu.memory_space<vmem>>, vector<1x8x8xf32>,
      %113 = vector.extract_strided_slice %108 {offsets = [0, 0], sizes = [8, 8], strides = [1, 1]} : vector<8x32xf32> to vector<8x8xf32>
      %c0_67 = arith.constant 0 : index
      %c0_68 = arith.constant 0 : index
      %c0_69 = arith.constant 0 : index
      %114 = vector.load %arg8[%c0_67, %c0_68, %c0_69] : memref<4x8x8xf32, #tpu.memory_space<vmem>>, vector<1x8x8xf32>
      %115 = vector.shape_cast %114 : vector<1x8x8xf32> to vector<8x8xf32>
      %116 = vector.shape_cast %113 : vector<8x8xf32> to vector<1x8x8xf32>
      tpu.vector_store %arg8[%c0_67, %c0_68, %c0_69], %116 {strides = array<i32>} : memref<4x8x8xf32, #tpu.memory_space<vmem>>, vector<1x8x8xf32>,
      %117 = vector.extract_strided_slice %106 {offsets = [0, 8], sizes = [8, 8], strides = [1, 1]} : vector<8x32xf32> to vector<8x8xf32>
      %c1_70 = arith.constant 1 : index
      %c0_71 = arith.constant 0 : index
      %c0_72 = arith.constant 0 : index
      %118 = vector.load %arg7[%c1_70, %c0_71, %c0_72] : memref<4x8x8xf32, #tpu.memory_space<vmem>>, vector<1x8x8xf32>
      %119 = vector.shape_cast %118 : vector<1x8x8xf32> to vector<8x8xf32>
      %120 = vector.shape_cast %117 : vector<8x8xf32> to vector<1x8x8xf32>
      tpu.vector_store %arg7[%c1_70, %c0_71, %c0_72], %120 {strides = array<i32>} : memref<4x8x8xf32, #tpu.memory_space<vmem>>, vector<1x8x8xf32>,
      %121 = vector.extract_strided_slice %108 {offsets = [0, 8], sizes = [8, 8], strides = [1, 1]} : vector<8x32xf32> to vector<8x8xf32>
      %c1_73 = arith.constant 1 : index
      %c0_74 = arith.constant 0 : index
      %c0_75 = arith.constant 0 : index
      %122 = vector.load %arg8[%c1_73, %c0_74, %c0_75] : memref<4x8x8xf32, #tpu.memory_space<vmem>>, vector<1x8x8xf32>
      %123 = vector.shape_cast %122 : vector<1x8x8xf32> to vector<8x8xf32>
      %124 = vector.shape_cast %121 : vector<8x8xf32> to vector<1x8x8xf32>
      tpu.vector_store %arg8[%c1_73, %c0_74, %c0_75], %124 {strides = array<i32>} : memref<4x8x8xf32, #tpu.memory_space<vmem>>, vector<1x8x8xf32>,
      %125 = vector.extract_strided_slice %106 {offsets = [0, 16], sizes = [8, 8], strides = [1, 1]} : vector<8x32xf32> to vector<8x8xf32>
      %c2_76 = arith.constant 2 : index
      %c0_77 = arith.constant 0 : index
      %c0_78 = arith.constant 0 : index
      %126 = vector.load %arg7[%c2_76, %c0_77, %c0_78] : memref<4x8x8xf32, #tpu.memory_space<vmem>>, vector<1x8x8xf32>
      %127 = vector.shape_cast %126 : vector<1x8x8xf32> to vector<8x8xf32>
      %128 = vector.shape_cast %125 : vector<8x8xf32> to vector<1x8x8xf32>
      tpu.vector_store %arg7[%c2_76, %c0_77, %c0_78], %128 {strides = array<i32>} : memref<4x8x8xf32, #tpu.memory_space<vmem>>, vector<1x8x8xf32>,
      %129 = vector.extract_strided_slice %108 {offsets = [0, 16], sizes = [8, 8], strides = [1, 1]} : vector<8x32xf32> to vector<8x8xf32>
      %c2_79 = arith.constant 2 : index
      %c0_80 = arith.constant 0 : index
      %c0_81 = arith.constant 0 : index
      %130 = vector.load %arg8[%c2_79, %c0_80, %c0_81] : memref<4x8x8xf32, #tpu.memory_space<vmem>>, vector<1x8x8xf32>
      %131 = vector.shape_cast %130 : vector<1x8x8xf32> to vector<8x8xf32>
      %132 = vector.shape_cast %129 : vector<8x8xf32> to vector<1x8x8xf32>
      tpu.vector_store %arg8[%c2_79, %c0_80, %c0_81], %132 {strides = array<i32>} : memref<4x8x8xf32, #tpu.memory_space<vmem>>, vector<1x8x8xf32>,
      %133 = vector.extract_strided_slice %106 {offsets = [0, 24], sizes = [8, 8], strides = [1, 1]} : vector<8x32xf32> to vector<8x8xf32>
      %c3_82 = arith.constant 3 : index
      %c0_83 = arith.constant 0 : index
      %c0_84 = arith.constant 0 : index
      %134 = vector.load %arg7[%c3_82, %c0_83, %c0_84] : memref<4x8x8xf32, #tpu.memory_space<vmem>>, vector<1x8x8xf32>
      %135 = vector.shape_cast %134 : vector<1x8x8xf32> to vector<8x8xf32>
      %136 = vector.shape_cast %133 : vector<8x8xf32> to vector<1x8x8xf32>
      tpu.vector_store %arg7[%c3_82, %c0_83, %c0_84], %136 {strides = array<i32>} : memref<4x8x8xf32, #tpu.memory_space<vmem>>, vector<1x8x8xf32>,
      %137 = vector.extract_strided_slice %108 {offsets = [0, 24], sizes = [8, 8], strides = [1, 1]} : vector<8x32xf32> to vector<8x8xf32>
      %c3_85 = arith.constant 3 : index
      %c0_86 = arith.constant 0 : index
      %c0_87 = arith.constant 0 : index
      %138 = vector.load %arg8[%c3_85, %c0_86, %c0_87] : memref<4x8x8xf32, #tpu.memory_space<vmem>>, vector<1x8x8xf32>
      %139 = vector.shape_cast %138 : vector<1x8x8xf32> to vector<8x8xf32>
      %140 = vector.shape_cast %137 : vector<8x8xf32> to vector<1x8x8xf32>
      tpu.vector_store %arg8[%c3_85, %c0_86, %c0_87], %140 {strides = array<i32>} : memref<4x8x8xf32, #tpu.memory_space<vmem>>, vector<1x8x8xf32>,
    } else {
    }
    %c8_i32 = arith.constant 8 : i32
    %3 = arith.muli %arg1, %c8_i32 : i32
    %4 = tpu.assume_multiple %3, 8 : i32
    %c0 = arith.constant 0 : index
    %5 = arith.index_cast %4 : i32 to index
    %c0_1 = arith.constant 0 : index
    %6 = vector.load %arg2[%c0, %5, %c0_1] : memref<1x8x32xf32, #tpu.memory_space<vmem>>, vector<1x8x32xf32>
    %7 = vector.shape_cast %6 : vector<1x8x32xf32> to vector<8x32xf32>
    %c0_2 = arith.constant 0 : index
    %c0_3 = arith.constant 0 : index
    %8 = vector.load %arg3[%c0_2, %c0_3] : memref<32x96xf32, #tpu.memory_space<vmem>>, vector<32x32xf32>
    %cst = arith.constant dense<0.000000e+00> : vector<8x32xf32>
    %9 = tpu.matmul %7, %8, %cst {dimension_numbers = #tpu.dot_dimension_numbers<[1], [0], [0], [1], [0, 0, 1, 1], [], []>} : vector<8x32xf32>, vector<32x32xf32>, vector<8x32xf32> -> vector<8x32xf32>
    %cst_4 = arith.constant 0.353553385 : f32
    %10 = vector.broadcast %cst_4 : f32 to vector<8x32xf32>
    %11 = arith.mulf %9, %10 : vector<8x32xf32>
    %cst_5 = arith.constant 0.000000e+00 : f32
    %12 = vector.broadcast %cst_5 : f32 to vector<8x32xf32>
    %13 = vector.extract_strided_slice %11 {offsets = [0, 0], sizes = [8, 8], strides = [1, 1]} : vector<8x32xf32> to vector<8x8xf32>
    %c0_6 = arith.constant 0 : index
    %c0_7 = arith.constant 0 : index
    %c0_8 = arith.constant 0 : index
    %14 = vector.load %arg7[%c0_6, %c0_7, %c0_8] : memref<4x8x8xf32, #tpu.memory_space<vmem>>, vector<1x8x8xf32>
    %15 = vector.shape_cast %14 : vector<1x8x8xf32> to vector<8x8xf32>
    %16 = tpu.transpose %15, [1, 0] : vector<8x8xf32> -> vector<8x8xf32>
    %cst_9 = arith.constant dense<0.000000e+00> : vector<8x8xf32>
    %17 = tpu.matmul %13, %16, %cst_9 {dimension_numbers = #tpu.dot_dimension_numbers<[1], [0], [0], [1], [0, 0, 1, 1], [], []>} : vector<8x8xf32>, vector<8x8xf32>, vector<8x8xf32> -> vector<8x8xf32>
    %cst_10 = arith.constant dense<0xFF800000> : vector<8xf32>
    %18 = vector.multi_reduction <maximumf>, %17, %cst_10 [1] : vector<8x8xf32> to vector<8xf32>
    %19 = vector.shape_cast %18 : vector<8xf32> to vector<8x1xf32>
    %20 = vector.broadcast %19 : vector<8x1xf32> to vector<8x8xf32>
    %21 = arith.subf %17, %20 : vector<8x8xf32>
    %22 = math.exp %21 : vector<8x8xf32>
    %cst_11 = arith.constant dense<0.000000e+00> : vector<8xf32>
    %23 = vector.multi_reduction <add>, %22, %cst_11 [1] : vector<8x8xf32> to vector<8xf32>
    %24 = vector.shape_cast %23 : vector<8xf32> to vector<8x1xf32>
    %25 = tpu.reciprocal %24 {approx = true} : vector<8x1xf32> -> vector<8x1xf32>
    %26 = vector.broadcast %25 : vector<8x1xf32> to vector<8x8xf32>
    %27 = arith.mulf %22, %26 : vector<8x8xf32>
    %c0_12 = arith.constant 0 : index
    %c0_13 = arith.constant 0 : index
    %c0_14 = arith.constant 0 : index
    %28 = vector.load %arg8[%c0_12, %c0_13, %c0_14] : memref<4x8x8xf32, #tpu.memory_space<vmem>>, vector<1x8x8xf32>
    %29 = vector.shape_cast %28 : vector<1x8x8xf32> to vector<8x8xf32>
    %cst_15 = arith.constant dense<0.000000e+00> : vector<8x8xf32>
    %30 = tpu.matmul %27, %29, %cst_15 {dimension_numbers = #tpu.dot_dimension_numbers<[1], [0], [0], [1], [0, 0, 1, 1], [], []>} : vector<8x8xf32>, vector<8x8xf32>, vector<8x8xf32> -> vector<8x8xf32>
    %c0_16 = arith.constant 0 : index
    %c0_17 = arith.constant 0 : index
    %31 = vector.load %arg4[%c0_16, %c0_17] : memref<32x32xf32, #tpu.memory_space<vmem>>, vector<8x32xf32>
    %cst_18 = arith.constant dense<0.000000e+00> : vector<8x32xf32>
    %32 = tpu.matmul %30, %31, %cst_18 {dimension_numbers = #tpu.dot_dimension_numbers<[1], [0], [0], [1], [0, 0, 1, 1], [], []>} : vector<8x8xf32>, vector<8x32xf32>, vector<8x32xf32> -> vector<8x32xf32>
    %33 = arith.addf %12, %32 : vector<8x32xf32>
    %34 = vector.extract_strided_slice %11 {offsets = [0, 8], sizes = [8, 8], strides = [1, 1]} : vector<8x32xf32> to vector<8x8xf32>
    %c1 = arith.constant 1 : index
    %c0_19 = arith.constant 0 : index
    %c0_20 = arith.constant 0 : index
    %35 = vector.load %arg7[%c1, %c0_19, %c0_20] : memref<4x8x8xf32, #tpu.memory_space<vmem>>, vector<1x8x8xf32>
    %36 = vector.shape_cast %35 : vector<1x8x8xf32> to vector<8x8xf32>
    %37 = tpu.transpose %36, [1, 0] : vector<8x8xf32> -> vector<8x8xf32>
    %cst_21 = arith.constant dense<0.000000e+00> : vector<8x8xf32>
    %38 = tpu.matmul %34, %37, %cst_21 {dimension_numbers = #tpu.dot_dimension_numbers<[1], [0], [0], [1], [0, 0, 1, 1], [], []>} : vector<8x8xf32>, vector<8x8xf32>, vector<8x8xf32> -> vector<8x8xf32>
    %cst_22 = arith.constant dense<0xFF800000> : vector<8xf32>
    %39 = vector.multi_reduction <maximumf>, %38, %cst_22 [1] : vector<8x8xf32> to vector<8xf32>
    %40 = vector.shape_cast %39 : vector<8xf32> to vector<8x1xf32>
    %41 = vector.broadcast %40 : vector<8x1xf32> to vector<8x8xf32>
    %42 = arith.subf %38, %41 : vector<8x8xf32>
    %43 = math.exp %42 : vector<8x8xf32>
    %cst_23 = arith.constant dense<0.000000e+00> : vector<8xf32>
    %44 = vector.multi_reduction <add>, %43, %cst_23 [1] : vector<8x8xf32> to vector<8xf32>
    %45 = vector.shape_cast %44 : vector<8xf32> to vector<8x1xf32>
    %46 = tpu.reciprocal %45 {approx = true} : vector<8x1xf32> -> vector<8x1xf32>
    %47 = vector.broadcast %46 : vector<8x1xf32> to vector<8x8xf32>
    %48 = arith.mulf %43, %47 : vector<8x8xf32>
    %c1_24 = arith.constant 1 : index
    %c0_25 = arith.constant 0 : index
    %c0_26 = arith.constant 0 : index
    %49 = vector.load %arg8[%c1_24, %c0_25, %c0_26] : memref<4x8x8xf32, #tpu.memory_space<vmem>>, vector<1x8x8xf32>
    %50 = vector.shape_cast %49 : vector<1x8x8xf32> to vector<8x8xf32>
    %cst_27 = arith.constant dense<0.000000e+00> : vector<8x8xf32>
    %51 = tpu.matmul %48, %50, %cst_27 {dimension_numbers = #tpu.dot_dimension_numbers<[1], [0], [0], [1], [0, 0, 1, 1], [], []>} : vector<8x8xf32>, vector<8x8xf32>, vector<8x8xf32> -> vector<8x8xf32>
    %c8 = arith.constant 8 : index
    %c0_28 = arith.constant 0 : index
    %52 = vector.load %arg4[%c8, %c0_28] : memref<32x32xf32, #tpu.memory_space<vmem>>, vector<8x32xf32>
    %cst_29 = arith.constant dense<0.000000e+00> : vector<8x32xf32>
    %53 = tpu.matmul %51, %52, %cst_29 {dimension_numbers = #tpu.dot_dimension_numbers<[1], [0], [0], [1], [0, 0, 1, 1], [], []>} : vector<8x8xf32>, vector<8x32xf32>, vector<8x32xf32> -> vector<8x32xf32>
    %54 = arith.addf %33, %53 : vector<8x32xf32>
    %55 = vector.extract_strided_slice %11 {offsets = [0, 16], sizes = [8, 8], strides = [1, 1]} : vector<8x32xf32> to vector<8x8xf32>
    %c2 = arith.constant 2 : index
    %c0_30 = arith.constant 0 : index
    %c0_31 = arith.constant 0 : index
    %56 = vector.load %arg7[%c2, %c0_30, %c0_31] : memref<4x8x8xf32, #tpu.memory_space<vmem>>, vector<1x8x8xf32>
    %57 = vector.shape_cast %56 : vector<1x8x8xf32> to vector<8x8xf32>
    %58 = tpu.transpose %57, [1, 0] : vector<8x8xf32> -> vector<8x8xf32>
    %cst_32 = arith.constant dense<0.000000e+00> : vector<8x8xf32>
    %59 = tpu.matmul %55, %58, %cst_32 {dimension_numbers = #tpu.dot_dimension_numbers<[1], [0], [0], [1], [0, 0, 1, 1], [], []>} : vector<8x8xf32>, vector<8x8xf32>, vector<8x8xf32> -> vector<8x8xf32>
    %cst_33 = arith.constant dense<0xFF800000> : vector<8xf32>
    %60 = vector.multi_reduction <maximumf>, %59, %cst_33 [1] : vector<8x8xf32> to vector<8xf32>
    %61 = vector.shape_cast %60 : vector<8xf32> to vector<8x1xf32>
    %62 = vector.broadcast %61 : vector<8x1xf32> to vector<8x8xf32>
    %63 = arith.subf %59, %62 : vector<8x8xf32>
    %64 = math.exp %63 : vector<8x8xf32>
    %cst_34 = arith.constant dense<0.000000e+00> : vector<8xf32>
    %65 = vector.multi_reduction <add>, %64, %cst_34 [1] : vector<8x8xf32> to vector<8xf32>
    %66 = vector.shape_cast %65 : vector<8xf32> to vector<8x1xf32>
    %67 = tpu.reciprocal %66 {approx = true} : vector<8x1xf32> -> vector<8x1xf32>
    %68 = vector.broadcast %67 : vector<8x1xf32> to vector<8x8xf32>
    %69 = arith.mulf %64, %68 : vector<8x8xf32>
    %c2_35 = arith.constant 2 : index
    %c0_36 = arith.constant 0 : index
    %c0_37 = arith.constant 0 : index
    %70 = vector.load %arg8[%c2_35, %c0_36, %c0_37] : memref<4x8x8xf32, #tpu.memory_space<vmem>>, vector<1x8x8xf32>
    %71 = vector.shape_cast %70 : vector<1x8x8xf32> to vector<8x8xf32>
    %cst_38 = arith.constant dense<0.000000e+00> : vector<8x8xf32>
    %72 = tpu.matmul %69, %71, %cst_38 {dimension_numbers = #tpu.dot_dimension_numbers<[1], [0], [0], [1], [0, 0, 1, 1], [], []>} : vector<8x8xf32>, vector<8x8xf32>, vector<8x8xf32> -> vector<8x8xf32>
    %c16 = arith.constant 16 : index
    %c0_39 = arith.constant 0 : index
    %73 = vector.load %arg4[%c16, %c0_39] : memref<32x32xf32, #tpu.memory_space<vmem>>, vector<8x32xf32>
    %cst_40 = arith.constant dense<0.000000e+00> : vector<8x32xf32>
    %74 = tpu.matmul %72, %73, %cst_40 {dimension_numbers = #tpu.dot_dimension_numbers<[1], [0], [0], [1], [0, 0, 1, 1], [], []>} : vector<8x8xf32>, vector<8x32xf32>, vector<8x32xf32> -> vector<8x32xf32>
    %75 = arith.addf %54, %74 : vector<8x32xf32>
    %76 = vector.extract_strided_slice %11 {offsets = [0, 24], sizes = [8, 8], strides = [1, 1]} : vector<8x32xf32> to vector<8x8xf32>
    %c3 = arith.constant 3 : index
    %c0_41 = arith.constant 0 : index
    %c0_42 = arith.constant 0 : index
    %77 = vector.load %arg7[%c3, %c0_41, %c0_42] : memref<4x8x8xf32, #tpu.memory_space<vmem>>, vector<1x8x8xf32>
    %78 = vector.shape_cast %77 : vector<1x8x8xf32> to vector<8x8xf32>
    %79 = tpu.transpose %78, [1, 0] : vector<8x8xf32> -> vector<8x8xf32>
    %cst_43 = arith.constant dense<0.000000e+00> : vector<8x8xf32>
    %80 = tpu.matmul %76, %79, %cst_43 {dimension_numbers = #tpu.dot_dimension_numbers<[1], [0], [0], [1], [0, 0, 1, 1], [], []>} : vector<8x8xf32>, vector<8x8xf32>, vector<8x8xf32> -> vector<8x8xf32>
    %cst_44 = arith.constant dense<0xFF800000> : vector<8xf32>
    %81 = vector.multi_reduction <maximumf>, %80, %cst_44 [1] : vector<8x8xf32> to vector<8xf32>
    %82 = vector.shape_cast %81 : vector<8xf32> to vector<8x1xf32>
    %83 = vector.broadcast %82 : vector<8x1xf32> to vector<8x8xf32>
    %84 = arith.subf %80, %83 : vector<8x8xf32>
    %85 = math.exp %84 : vector<8x8xf32>
    %cst_45 = arith.constant dense<0.000000e+00> : vector<8xf32>
    %86 = vector.multi_reduction <add>, %85, %cst_45 [1] : vector<8x8xf32> to vector<8xf32>
    %87 = vector.shape_cast %86 : vector<8xf32> to vector<8x1xf32>
    %88 = tpu.reciprocal %87 {approx = true} : vector<8x1xf32> -> vector<8x1xf32>
    %89 = vector.broadcast %88 : vector<8x1xf32> to vector<8x8xf32>
    %90 = arith.mulf %85, %89 : vector<8x8xf32>
    %c3_46 = arith.constant 3 : index
    %c0_47 = arith.constant 0 : index
    %c0_48 = arith.constant 0 : index
    %91 = vector.load %arg8[%c3_46, %c0_47, %c0_48] : memref<4x8x8xf32, #tpu.memory_space<vmem>>, vector<1x8x8xf32>
    %92 = vector.shape_cast %91 : vector<1x8x8xf32> to vector<8x8xf32>
    %cst_49 = arith.constant dense<0.000000e+00> : vector<8x8xf32>
    %93 = tpu.matmul %90, %92, %cst_49 {dimension_numbers = #tpu.dot_dimension_numbers<[1], [0], [0], [1], [0, 0, 1, 1], [], []>} : vector<8x8xf32>, vector<8x8xf32>, vector<8x8xf32> -> vector<8x8xf32>
    %c24 = arith.constant 24 : index
    %c0_50 = arith.constant 0 : index
    %94 = vector.load %arg4[%c24, %c0_50] : memref<32x32xf32, #tpu.memory_space<vmem>>, vector<8x32xf32>
    %cst_51 = arith.constant dense<0.000000e+00> : vector<8x32xf32>
    %95 = tpu.matmul %93, %94, %cst_51 {dimension_numbers = #tpu.dot_dimension_numbers<[1], [0], [0], [1], [0, 0, 1, 1], [], []>} : vector<8x8xf32>, vector<8x32xf32>, vector<8x32xf32> -> vector<8x32xf32>
    %96 = arith.addf %75, %95 : vector<8x32xf32>
    %c0_52 = arith.constant 0 : index
    %c0_53 = arith.constant 0 : index
    %97 = vector.load %arg5[%c0_52, %c0_53] : memref<1x32xf32, #tpu.memory_space<vmem>>, vector<1x32xf32>
    %98 = vector.broadcast %97 : vector<1x32xf32> to vector<8x32xf32>
    %99 = arith.addf %96, %98 : vector<8x32xf32>
    %c0_54 = arith.constant 0 : index
    %c0_55 = arith.constant 0 : index
    %c0_56 = arith.constant 0 : index
    %100 = vector.load %arg6[%c0_54, %c0_55, %c0_56] : memref<1x8x32xf32, #tpu.memory_space<vmem>>, vector<1x8x32xf32>
    %101 = vector.shape_cast %100 : vector<1x8x32xf32> to vector<8x32xf32>
    %102 = vector.shape_cast %99 : vector<8x32xf32> to vector<1x8x32xf32>
    tpu.vector_store %arg6[%c0_54, %c0_55, %c0_56], %102 {strides = array<i32>} : memref<1x8x32xf32, #tpu.memory_space<vmem>>, vector<1x8x32xf32>,
    return
  }
  func.func @transform_0(%arg0: i32, %arg1: i32) -> (i32, i32, i32) {
    %c0_i32 = arith.constant 0 : i32
    %c0_i32_0 = arith.constant 0 : i32
    %c0_i32_1 = arith.constant 0 : i32
    return %arg0, %c0_i32, %c0_i32_0 : i32, i32, i32
  }
  func.func @transform_1(%arg0: i32, %arg1: i32) -> (i32, i32) {
    %c0_i32 = arith.constant 0 : i32
    %c0_i32_0 = arith.constant 0 : i32
    %c0_i32_1 = arith.constant 0 : i32
    return %c0_i32, %c0_i32_0 : i32, i32
  }
  func.func @transform_2(%arg0: i32, %arg1: i32) -> (i32, i32) {
    %c0_i32 = arith.constant 0 : i32
    %c0_i32_0 = arith.constant 0 : i32
    %c0_i32_1 = arith.constant 0 : i32
    return %c0_i32, %c0_i32_0 : i32, i32
  }
  func.func @transform_3(%arg0: i32, %arg1: i32) -> (i32, i32) {
    %c0_i32 = arith.constant 0 : i32
    %c0_i32_0 = arith.constant 0 : i32
    %c0_i32_1 = arith.constant 0 : i32
    return %c0_i32, %c0_i32_0 : i32, i32
  }
  func.func @transform_4(%arg0: i32, %arg1: i32) -> (i32, i32, i32) {
    %c0_i32 = arith.constant 0 : i32
    %c0_i32_0 = arith.constant 0 : i32
    return %arg0, %arg1, %c0_i32 : i32, i32, i32
  }
}

</mosaic_0001>

<llo_original>
// kernel: tpu_custom_call.1
$region0: #{tpu_custom_call.1}
  #allocation0 [shape = 'u32[]', space=smem, size = 0x4, offset = 0x4, fixed_abs, tag = 'smem constant byte address 0x4 - core index']
  #allocation1 [shape = 'u32[144,128]{1,0:T(1,128)}', space=vmem, size = 0x12000, scoped, tag = 'internal scratch']
  #allocation2 [shape = 'f32[4,8,8]{2,1,0:T(8,128)}', space=vmem, size = 0x4000, scoped, tag = 'scratch operand']
  #allocation3 [shape = 'f32[4,8,8]{2,1,0:T(8,128)}', space=vmem, size = 0x4000, scoped, tag = 'scratch operand']
  %s0 = inlined_call_operand.hbm [shape: f32[2,8,32], index: 0, kind: input, shape index: {}]
  %s1 = inlined_call_operand.hbm [shape: f32[32,96], index: 1, kind: input, shape index: {}]
  %s2 = inlined_call_operand.hbm [shape: f32[32,32], index: 2, kind: input, shape index: {}]
  %s3 = inlined_call_operand.vmem [shape: f32[1,32], index: 3, kind: input, shape index: {}]
  %s4 = inlined_call_operand.hbm [shape: f32[2,8,32], index: 4, kind: output, shape index: {}]
  %s5 = sld [smem:[#allocation0]]
  $region65: #{tpu_custom_call.1} parent=0
    _
  %s7 = ssub.s32 1, %s5
  %s8 = scalar_select 0, %s7, %s5
  $region1: #{tpu_custom_call.1} parent=0
    #allocation4 [shape = 'u8[8192]{0}', space=vmem, size = 0x2000, scoped, tag = 'input window, operand 0']
    #allocation5 [shape = 's32[2]{0}', space=sflag, size = 0x8, scoped, tag = 'scoped memory for tpu_custom_call.1']
    #allocation6 [shape = 's32[2]{0}', space=sflag, size = 0x8, scoped, tag = 'scoped memory for tpu_custom_call.1']
    #allocation7 [shape = 'u8[16384]{0}', space=vmem, size = 0x4000, scoped, tag = 'input window, operand 1, single buffered']
    #allocation8 [shape = 's32[1]{0}', space=sflag, size = 0x4, scoped, tag = 'scoped memory for tpu_custom_call.1']
    #allocation9 [shape = 'u8[16384]{0}', space=vmem, size = 0x4000, scoped, tag = 'input window, operand 2, single buffered']
    #allocation10 [shape = 'u8[8192]{0}', space=vmem, size = 0x2000, scoped, tag = 'output window, operand 0']
    %9 = vsyncpa [#allocation5], 0
    %s10 = scalar_lea.sflag [#allocation5], 1
    %11 = vsyncpa %s10, 0
    %12 = vsyncpa [#allocation8], 0
    %13 = vsyncpa [#allocation6], 0
    %s14 = scalar_lea.sflag [#allocation6], 1
    %15 = vsyncpa %s14, 0
    loop: start=0, step=1, limit=4
    $region2: #{tpu_custom_call.1} parent=1 // loop_pre_header
      _
    $region3: #{tpu_custom_call.1} parent=1 // loop_header
      %s17 = sphi 0, %s21
      %p18 = scmp.ge.s32.totalorder %s17, 4
      %s24 = sphi 0, %s36
      %s25 = sphi 0, %s32
      %s26 = sphi 0, %s24
      %s27 = sphi 0, %s25
      %s28 = sphi 0, %s26
      %s29 = sphi 0, %s27
      %s39 = sphi 0, %s41
      %s42 = sphi 0, %s39
      %s43 = sphi 0, %s42
      %s59 = sphi 0, %s43
      %s63 = sphi 0, %s63
      %s65 = sphi 0, %s63
      %s66 = sphi 0, %s65
      %s80 = sphi 0, %s66
      %s84 = sphi 0, %s84
      %s86 = sphi 0, %s84
      %s87 = sphi 0, %s86
      %s101 = sphi 0, %s87
      %s105 = sphi 0, %s105
      %s107 = sphi 0, %s105
      %s108 = sphi 0, %s107
      %s122 = sphi 0, %s108
      %s130 = sphi 0, %s132
      %s133 = sphi 0, %s130
      %s134 = sphi 0, %s133
      %s150 = sphi 0, %s134
    $region4: #{tpu_custom_call.1} parent=1 // loop_header_branch
      %20 = sbr.rel (%p18) target = $region8
    $region5: #{tpu_custom_call.1} parent=1 // loop_body
      %s22 = ssub.s32 %s17, 1
      %s23 = ssub.s32 %s17, 2
      %s30 = sadd.s32 1, %s25
      %p31 = scmp.ge.s32.totalorder %s30, 1
      %s32 = scalar_select %p31, 0, %s30
      %s33 = sadd.s32 1, %s24
      %s34 = scalar_select %p31, %s33, %s24
      %p35 = scmp.ge.s32.totalorder %s34, 2
      %s36 = scalar_select %p35, 0, %s34
      %s37 = ssub.s32 %s24, %s36
      %p38 = scmp.eq.s32.totalorder %s37, 0
      %s40 = sadd.s32 %s39, 1
      %s41 = scalar_select %p38, %s39, %s40
      %p44 = pneg %p38
      %p45 = scmp.eq.s32.totalorder %s17, 1
      %p46 = por %p44, %p45
      %p47 = scmp.ne.s32.totalorder %s39, %s42
      %p48 = scmp.eq.s32.totalorder %s17, 0
      %p49 = por %p47, %p48
      %p50 = scmp.ne.s32.totalorder %s39, %s42
      %p51 = scmp.eq.s32.totalorder %s22, 1
      %p52 = por %p50, %p51
      %p53 = scmp.ne.s32.totalorder %s42, %s43
      %p54 = scmp.eq.s32.totalorder %s22, 0
      %p55 = por %p53, %p54
      %p56 = scmp.ne.s32.totalorder %s42, %s43
      %p57 = scmp.eq.s32.totalorder %s23, 1
      %p58 = por %p56, %p57
      %p60 = scmp.ne.s32.totalorder %s43, %s59
      %p61 = scmp.eq.s32.totalorder %s23, 0
      %p62 = por %p60, %p61
      %s64 = sadd.s32 %s63, 1
      %p67 = scmp.eq.s32.totalorder %s17, 1
      %p68 = scmp.ne.s32.totalorder %s63, %s65
      %p69 = scmp.eq.s32.totalorder %s17, 0
      %p70 = por %p68, %p69
      %p71 = scmp.ne.s32.totalorder %s63, %s65
      %p72 = scmp.eq.s32.totalorder %s22, 1
      %p73 = por %p71, %p72
      %p74 = scmp.ne.s32.totalorder %s65, %s66
      %p75 = scmp.eq.s32.totalorder %s22, 0
      %p76 = por %p74, %p75
      %p77 = scmp.ne.s32.totalorder %s65, %s66
      %p78 = scmp.eq.s32.totalorder %s23, 1
      %p79 = por %p77, %p78
      %p81 = scmp.ne.s32.totalorder %s66, %s80
      %p82 = scmp.eq.s32.totalorder %s23, 0
      %p83 = por %p81, %p82
      %s85 = sadd.s32 %s84, 1
      %p88 = scmp.eq.s32.totalorder %s17, 1
      %p89 = scmp.ne.s32.totalorder %s84, %s86
      %p90 = scmp.eq.s32.totalorder %s17, 0
      %p91 = por %p89, %p90
      %p92 = scmp.ne.s32.totalorder %s84, %s86
      %p93 = scmp.eq.s32.totalorder %s22, 1
      %p94 = por %p92, %p93
      %p95 = scmp.ne.s32.totalorder %s86, %s87
      %p96 = scmp.eq.s32.totalorder %s22, 0
      %p97 = por %p95, %p96
      %p98 = scmp.ne.s32.totalorder %s86, %s87
      %p99 = scmp.eq.s32.totalorder %s23, 1
      %p100 = por %p98, %p99
      %p102 = scmp.ne.s32.totalorder %s87, %s101
      %p103 = scmp.eq.s32.totalorder %s23, 0
      %p104 = por %p102, %p103
      %s106 = sadd.s32 %s105, 1
      %p109 = scmp.eq.s32.totalorder %s17, 1
      %p110 = scmp.ne.s32.totalorder %s105, %s107
      %p111 = scmp.eq.s32.totalorder %s17, 0
      %p112 = por %p110, %p111
      %p113 = scmp.ne.s32.totalorder %s105, %s107
      %p114 = scmp.eq.s32.totalorder %s22, 1
      %p115 = por %p113, %p114
      %p116 = scmp.ne.s32.totalorder %s107, %s108
      %p117 = scmp.eq.s32.totalorder %s22, 0
      %p118 = por %p116, %p117
      %p119 = scmp.ne.s32.totalorder %s107, %s108
      %p120 = scmp.eq.s32.totalorder %s23, 1
      %p121 = por %p119, %p120
      %p123 = scmp.ne.s32.totalorder %s108, %s122
      %p124 = scmp.eq.s32.totalorder %s23, 0
      %p125 = por %p123, %p124
      %s126 = ssub.s32 %s24, %s36
      %s127 = ssub.s32 %s25, %s32
      %s128 = sor.u32 %s126, %s127
      %p129 = scmp.eq.s32.totalorder %s128, 0
      %s131 = sadd.s32 %s130, 1
      %s132 = scalar_select %p129, %s130, %s131
      %p135 = pneg %p129
      %p136 = scmp.eq.s32.totalorder %s17, 1
      %p137 = por %p135, %p136
      %p138 = scmp.ne.s32.totalorder %s130, %s133
      %p139 = scmp.eq.s32.totalorder %s17, 0
      %p140 = por %p138, %p139
      %p141 = scmp.ne.s32.totalorder %s130, %s133
      %p142 = scmp.eq.s32.totalorder %s22, 1
      %p143 = por %p141, %p142
      %p144 = scmp.ne.s32.totalorder %s133, %s134
      %p145 = scmp.eq.s32.totalorder %s22, 0
      %p146 = por %p144, %p145
      %p147 = scmp.ne.s32.totalorder %s133, %s134
      %p148 = scmp.eq.s32.totalorder %s23, 1
      %p149 = por %p147, %p148
      %p151 = scmp.ne.s32.totalorder %s134, %s150
      %p152 = scmp.eq.s32.totalorder %s23, 0
      %p153 = por %p151, %p152
      %p154 = scmp.le.s32.totalorder 1, %s17
      %p155 = scmp.lt.s32.totalorder %s17, 3
      %p156 = pnand %p154, %p155
      %p157 = pneg %p156
      // Predicated region
      $region9: #{tpu_custom_call.1} parent=5 // pred_check
        _
      $region10: #{tpu_custom_call.1} parent=5 // pred_check_branch
        %159 = sbr.rel (%p156) target = $region12
      $region11: #{tpu_custom_call.1} parent=5 // pred_region
        %s160 = ssub.s32 %s17, 1
        // Predicated region
        $region13: #{tpu_custom_call.1} parent=11 // pred_check
          %p161 = pneg %p76
        $region14: #{tpu_custom_call.1} parent=11 // pred_check_branch
          %163 = sbr.rel (%p161) target = $region16
        $region15: #{tpu_custom_call.1} parent=11 // pred_region
          %s165 = ssub.s32 512, 512
          %166 = vsyncadd [#allocation8], %s165
          %s167 = sshll.u32 [#allocation7], 4
          %s168 = int_to_ptr.vmem [resolvable:$true] %s167
          %173 = dma.hbm_to_vmem [thread:$0]  %s1, 512, %s168, [#allocation8], 128, 128, 8
        $region16: #{tpu_custom_call.1} parent=11 // pred_fallthru
          _
        // Predicated region
        $region17: #{tpu_custom_call.1} parent=11 // pred_check
          %p174 = pneg %p97
        $region18: #{tpu_custom_call.1} parent=11 // pred_check_branch
          %176 = sbr.rel (%p174) target = $region20
        $region19: #{tpu_custom_call.1} parent=11 // pred_region
          %s178 = ssub.s32 512, 512
          %179 = vsyncadd [#allocation8], %s178
          %s180 = sshll.u32 [#allocation9], 4
          %s181 = int_to_ptr.vmem [resolvable:$true] %s180
          %186 = dma.hbm_to_vmem [thread:$0]  %s2, 512, %s181, [#allocation8], 128, 128, 8
        $region20: #{tpu_custom_call.1} parent=11 // pred_fallthru
          _
        // Predicated region
        $region21: #{tpu_custom_call.1} parent=11 // pred_check
          %p187 = pneg %p118
        $region22: #{tpu_custom_call.1} parent=11 // pred_check_branch
          %189 = sbr.rel (%p187) target = $region24
        $region23: #{tpu_custom_call.1} parent=11 // pred_region
          _
        $region24: #{tpu_custom_call.1} parent=11 // pred_fallthru
          _
      $region12: #{tpu_custom_call.1} parent=5 // pred_fallthru
        _
      %p190 = scmp.lt.s32.totalorder %s17, 2
      // Predicated region
      $region25: #{tpu_custom_call.1} parent=5 // pred_check
        %p191 = pneg %p190
      $region26: #{tpu_custom_call.1} parent=5 // pred_check_branch
        %193 = sbr.rel (%p191) target = $region28
      $region27: #{tpu_custom_call.1} parent=5 // pred_region
        // Predicated region
        $region29: #{tpu_custom_call.1} parent=27 // pred_check
          %p194 = pneg %p49
        $region30: #{tpu_custom_call.1} parent=27 // pred_check_branch
          %196 = sbr.rel (%p194) target = $region32
        $region31: #{tpu_custom_call.1} parent=27 // pred_region
          %s197 = sand.u32 %s39, 1
          %s198 = scalar_lea.sflag [#allocation5], %s197
          %s199 = sand.u32 %s39, 1
          %s200 = smul.addr %s199, 8
          %s201 = scalar_lea.vmem [#allocation4], %s200
          %s203 = ssub.s32 128, 128
          %204 = vsyncadd %s198, %s203
          %s205 = smul.addr %s24, 128
          %s206 = scalar_lea.hbm %s0, %s205
          %s208 = sshll.u32 %s201, 4
          %s209 = int_to_ptr.vmem [resolvable:$true] %s208
          %211 = dma.hbm_to_vmem [thread:$0]  %s206, 128, %s209, %s198
        $region32: #{tpu_custom_call.1} parent=27 // pred_fallthru
          _
      $region28: #{tpu_custom_call.1} parent=5 // pred_fallthru
        _
      %p212 = scmp.le.s32.totalorder 1, %s17
      %p213 = scmp.lt.s32.totalorder %s17, 3
      %p214 = pnand %p212, %p213
      %p215 = pneg %p214
      // Predicated region
      $region33: #{tpu_custom_call.1} parent=5 // pred_check
        _
      $region34: #{tpu_custom_call.1} parent=5 // pred_check_branch
        %217 = sbr.rel (%p214) target = $region36
      $region35: #{tpu_custom_call.1} parent=5 // pred_region
        %s218 = ssub.s32 %s17, 1
        %s219 = sand.u32 %s42, 1
        %s220 = scalar_lea.sflag [#allocation5], %s219
        %s221 = sand.u32 %s42, 1
        %s222 = smul.addr %s221, 8
        %s223 = scalar_lea.vmem [#allocation4], %s222
        // Predicated region
        $region37: #{tpu_custom_call.1} parent=35 // pred_check
          %p224 = pneg %p55
        $region38: #{tpu_custom_call.1} parent=35 // pred_check_branch
          %226 = sbr.rel (%p224) target = $region40
        $region39: #{tpu_custom_call.1} parent=35 // pred_region
          %227 = dma.done %s220, 128
        $region40: #{tpu_custom_call.1} parent=35 // pred_fallthru
          _
        // Predicated region
        $region41: #{tpu_custom_call.1} parent=35 // pred_check
          %p228 = pneg %p76
        $region42: #{tpu_custom_call.1} parent=35 // pred_check_branch
          %230 = sbr.rel (%p228) target = $region44
        $region43: #{tpu_custom_call.1} parent=35 // pred_region
          %231 = dma.done [#allocation8], 512
        $region44: #{tpu_custom_call.1} parent=35 // pred_fallthru
          _
        // Predicated region
        $region45: #{tpu_custom_call.1} parent=35 // pred_check
          %p232 = pneg %p97
        $region46: #{tpu_custom_call.1} parent=35 // pred_check_branch
          %234 = sbr.rel (%p232) target = $region48
        $region47: #{tpu_custom_call.1} parent=35 // pred_region
          %235 = dma.done [#allocation8], 512
        $region48: #{tpu_custom_call.1} parent=35 // pred_fallthru
          _
        %s236 = sand.u32 %s42, 1
        %s237 = scalar_lea.sflag [#allocation5], %s236
        %s238 = sand.u32 %s42, 1
        %s239 = smul.addr %s238, 8
        %s240 = scalar_lea.vmem [#allocation4], %s239
        %p241 = pneg %p55
        %p242 = pneg %p52
        %p243 = pneg %p76
        %p244 = pneg %p73
        %p245 = pneg %p97
        %p246 = pneg %p94
        %p247 = pneg %p118
        %p248 = pneg %p115
        %p249 = pneg %p146
        %p250 = pneg %p143
        %s251 = sand.u32 %s133, 1
        %s252 = scalar_lea.sflag [#allocation6], %s251
        %s253 = sand.u32 %s133, 1
        %s254 = smul.addr %s253, 8
        %s255 = scalar_lea.vmem [#allocation10], %s254
        %p256 = scmp.eq.s32.totalorder %s27, 0
        // Predicated region
        $region49: #{tpu_custom_call.1} parent=35 // pred_check
          %p257 = pneg %p256
        $region50: #{tpu_custom_call.1} parent=35 // pred_check_branch
          %259 = sbr.rel (%p257) target = $region52
        $region51: #{tpu_custom_call.1} parent=35 // pred_region
          %v260 = vld [vmem:[%s223] sm:$0xff]
          %v261 = vld [vmem:[#allocation7] sm:$0xff]
          %v262 = vld [vmem:[#allocation7 + $0x8] sm:$0xff]
          %v263 = vld [vmem:[#allocation7 + $0x10] sm:$0xff]
          %v264 = vld [vmem:[#allocation7 + $0x18] sm:$0xff]
          %269 = vrot.lane.b32.xlu0 %v261, 96
          %v270 = vpop.permute.xlu0 %269
          %271 = vrot.lane.b32.xlu0 %v262, 96
          %v272 = vpop.permute.xlu0 %271
          %273 = vrot.lane.b32.xlu0 %v263, 96
          %v274 = vpop.permute.xlu0 %273
          %275 = vrot.lane.b32.xlu0 %v264, 96
          %v276 = vpop.permute.xlu0 %275
          %vm281 = vcmask 261120
          %v283 = vsel %vm281, %v260, 0
          %285 = vmatprep.subr.mxu0 0.0
          %286 = vmatpush1.msra.mxu0 0.0
          %287 = vmatprep.subr.mxu0 0.0
          %288 = vmatpush1.msra.mxu0 0.0
          %289 = vmatprep.subr.mxu0 0.0
          %290 = vmatpush1.msra.mxu0 0.0
          %291 = vmatprep.subr.mxu0 0.0
          %292 = vmatpush1.msra.mxu0 0.0
          %293 = vmatprep.subr.mxu0 0.0
          %294 = vmatpush1.msra.mxu0 0.0
          %295 = vmatprep.subr.mxu0 0.0
          %296 = vmatpush1.msra.mxu0 0.0
          %297 = vmatprep.subr.mxu0 0.0
          %298 = vmatpush1.msra.mxu0 0.0
          %299 = vmatprep.subr.mxu0 0.0
          %300 = vmatpush1.msra.mxu0 0.0
          %301 = vmatprep.subr.mxu0 0.0
          %302 = vmatpush1.msra.mxu0 0.0
          %303 = vmatprep.subr.mxu0 0.0
          %304 = vmatpush1.msra.mxu0 0.0
          %305 = vmatprep.subr.mxu0 0.0
          %306 = vmatpush1.msra.mxu0 0.0
          %307 = vmatprep.subr.mxu0 0.0
          %308 = vmatpush1.msra.mxu0 0.0
          %309 = vmatprep.subr.mxu0 0.0
          %310 = vmatpush1.msra.mxu0 %v276
          %311 = vmatprep.subr.mxu0 0.0
          %312 = vmatpush1.msra.mxu0 %v274
          %313 = vmatprep.subr.mxu0 0.0
          %314 = vmatpush1.msra.mxu0 %v272
          %315 = vmatprep.subr.mxu0 0.0
          %316 = vmatpush1.msra.mxu0 %v270
          %317 = vmatprep.subr.mxu0 0.0
          %318 = vmatpush2.msra.mxu0 0.0
          %319 = vmatprep.subr.mxu0 0.0
          %320 = vmatpush2.msra.mxu0 0.0
          %321 = vmatprep.subr.mxu0 0.0
          %322 = vmatpush2.msra.mxu0 0.0
          %323 = vmatprep.subr.mxu0 0.0
          %324 = vmatpush2.msra.mxu0 0.0
          %325 = vmatprep.subr.mxu0 0.0
          %326 = vmatpush2.msra.mxu0 0.0
          %327 = vmatprep.subr.mxu0 0.0
          %328 = vmatpush2.msra.mxu0 0.0
          %329 = vmatprep.subr.mxu0 0.0
          %330 = vmatpush2.msra.mxu0 0.0
          %331 = vmatprep.subr.mxu0 0.0
          %332 = vmatpush2.msra.mxu0 0.0
          %333 = vmatprep.subr.mxu0 0.0
          %334 = vmatpush2.msra.mxu0 0.0
          %335 = vmatprep.subr.mxu0 0.0
          %336 = vmatpush2.msra.mxu0 0.0
          %337 = vmatprep.subr.mxu0 0.0
          %338 = vmatpush2.msra.mxu0 0.0
          %339 = vmatprep.subr.mxu0 0.0
          %340 = vmatpush2.msra.mxu0 0.0
          %341 = vmatprep.subr.mxu0 0.0
          %342 = vmatpush2.msra.mxu0 0.0
          %343 = vmatprep.subr.mxu0 0.0
          %344 = vmatpush2.msra.mxu0 0.0
          %345 = vmatprep.subr.mxu0 0.0
          %346 = vmatpush2.msra.mxu0 0.0
          %347 = vmatprep.subr.mxu0 0.0
          %348 = vmatpush2.msra.mxu0 0.0
          %349 = vmatprep.mubr.f32.mxu0 0.0
          %350 = vmatmul.mubr.f32.gmra.mxu0 %v283
          %v351 = vpop.f32.mrf.mxu0
          %v352 = vadd.f32 0.0, %v351
          %v353 = vpop.f32.mrf.mxu0
          %354 = vdwg.mxu0
          %355 = vrot.lane.b32.xlu0 %v261, 64
          %v356 = vpop.permute.xlu0 %355
          %357 = vrot.lane.b32.xlu0 %v262, 64
          %v358 = vpop.permute.xlu0 %357
          %359 = vrot.lane.b32.xlu0 %v263, 64
          %v360 = vpop.permute.xlu0 %359
          %361 = vrot.lane.b32.xlu0 %v264, 64
          %v362 = vpop.permute.xlu0 %361
          %367 = vmatprep.subr.mxu0 0.0
          %368 = vmatpush1.msra.mxu0 0.0
          %369 = vmatprep.subr.mxu0 0.0
          %370 = vmatpush1.msra.mxu0 0.0
          %371 = vmatprep.subr.mxu0 0.0
          %372 = vmatpush1.msra.mxu0 0.0
          %373 = vmatprep.subr.mxu0 0.0
          %374 = vmatpush1.msra.mxu0 0.0
          %375 = vmatprep.subr.mxu0 0.0
          %376 = vmatpush1.msra.mxu0 0.0
          %377 = vmatprep.subr.mxu0 0.0
          %378 = vmatpush1.msra.mxu0 0.0
          %379 = vmatprep.subr.mxu0 0.0
          %380 = vmatpush1.msra.mxu0 0.0
          %381 = vmatprep.subr.mxu0 0.0
          %382 = vmatpush1.msra.mxu0 0.0
          %383 = vmatprep.subr.mxu0 0.0
          %384 = vmatpush1.msra.mxu0 0.0
          %385 = vmatprep.subr.mxu0 0.0
          %386 = vmatpush1.msra.mxu0 0.0
          %387 = vmatprep.subr.mxu0 0.0
          %388 = vmatpush1.msra.mxu0 0.0
          %389 = vmatprep.subr.mxu0 0.0
          %390 = vmatpush1.msra.mxu0 0.0
          %391 = vmatprep.subr.mxu0 0.0
          %392 = vmatpush1.msra.mxu0 %v362
          %393 = vmatprep.subr.mxu0 0.0
          %394 = vmatpush1.msra.mxu0 %v360
          %395 = vmatprep.subr.mxu0 0.0
          %396 = vmatpush1.msra.mxu0 %v358
          %397 = vmatprep.subr.mxu0 0.0
          %398 = vmatpush1.msra.mxu0 %v356
          %399 = vmatprep.subr.mxu0 0.0
          %400 = vmatpush2.msra.mxu0 0.0
          %401 = vmatprep.subr.mxu0 0.0
          %402 = vmatpush2.msra.mxu0 0.0
          %403 = vmatprep.subr.mxu0 0.0
          %404 = vmatpush2.msra.mxu0 0.0
          %405 = vmatprep.subr.mxu0 0.0
          %406 = vmatpush2.msra.mxu0 0.0
          %407 = vmatprep.subr.mxu0 0.0
          %408 = vmatpush2.msra.mxu0 0.0
          %409 = vmatprep.subr.mxu0 0.0
          %410 = vmatpush2.msra.mxu0 0.0
          %411 = vmatprep.subr.mxu0 0.0
          %412 = vmatpush2.msra.mxu0 0.0
          %413 = vmatprep.subr.mxu0 0.0
          %414 = vmatpush2.msra.mxu0 0.0
          %415 = vmatprep.subr.mxu0 0.0
          %416 = vmatpush2.msra.mxu0 0.0
          %417 = vmatprep.subr.mxu0 0.0
          %418 = vmatpush2.msra.mxu0 0.0
          %419 = vmatprep.subr.mxu0 0.0
          %420 = vmatpush2.msra.mxu0 0.0
          %421 = vmatprep.subr.mxu0 0.0
          %422 = vmatpush2.msra.mxu0 0.0
          %423 = vmatprep.subr.mxu0 0.0
          %424 = vmatpush2.msra.mxu0 0.0
          %425 = vmatprep.subr.mxu0 0.0
          %426 = vmatpush2.msra.mxu0 0.0
          %427 = vmatprep.subr.mxu0 0.0
          %428 = vmatpush2.msra.mxu0 0.0
          %429 = vmatprep.subr.mxu0 0.0
          %430 = vmatpush2.msra.mxu0 0.0
          %431 = vmatprep.mubr.f32.mxu0 0.0
          %432 = vmatmul.mubr.f32.gmra.mxu0 %v283
          %v433 = vpop.f32.mrf.mxu0
          %v434 = vadd.f32 0.0, %v433
          %v435 = vpop.f32.mrf.mxu0
          %436 = vdwg.mxu0
          %vm437 = vcmask 64512
          %438 = vst.msk [vmem:[#allocation2] sm:$0xff] %vm437, %v352
          %439 = vst.msk [vmem:[#allocation3] sm:$0xff] %vm437, %v434
          %441 = vrot.lane.b32.xlu0 %v352, 120
          %v442 = vpop.permute.xlu0 %441
          %s444 = scalar_lea.vmem [#allocation2], 8
          %445 = vst.msk [vmem:[%s444] sm:$0xff] %vm437, %v442
          %447 = vrot.lane.b32.xlu0 %v434, 120
          %v448 = vpop.permute.xlu0 %447
          %s450 = scalar_lea.vmem [#allocation3], 8
          %451 = vst.msk [vmem:[%s450] sm:$0xff] %vm437, %v448
          %452 = vrot.lane.b32.xlu0 %v352, 112
          %v453 = vpop.permute.xlu0 %452
          %s455 = scalar_lea.vmem [#allocation2], 16
          %456 = vst.msk [vmem:[%s455] sm:$0xff] %vm437, %v453
          %457 = vrot.lane.b32.xlu0 %v434, 112
          %v458 = vpop.permute.xlu0 %457
          %s460 = scalar_lea.vmem [#allocation3], 16
          %461 = vst.msk [vmem:[%s460] sm:$0xff] %vm437, %v458
          %462 = vrot.lane.b32.xlu0 %v352, 104
          %v463 = vpop.permute.xlu0 %462
          %s465 = scalar_lea.vmem [#allocation2], 24
          %466 = vst.msk [vmem:[%s465] sm:$0xff] %vm437, %v463
          %467 = vrot.lane.b32.xlu0 %v434, 104
          %v468 = vpop.permute.xlu0 %467
          %s470 = scalar_lea.vmem [#allocation3], 24
          %471 = vst.msk [vmem:[%s470] sm:$0xff] %vm437, %v468
        $region52: #{tpu_custom_call.1} parent=35 // pred_fallthru
          _
        %s472 = smul.u32 %s27, 8
        %s473 = scalar_lea.vmem %s223, %s472 [#allocation4]
        %v474 = vld [vmem:[%s473] sm:$0xff]
        %v475 = vld [vmem:[#allocation7] sm:$0xff]
        %v476 = vld [vmem:[#allocation7 + $0x8] sm:$0xff]
        %v477 = vld [vmem:[#allocation7 + $0x10] sm:$0xff]
        %v478 = vld [vmem:[#allocation7 + $0x18] sm:$0xff]
        %vm479 = vcmask 261120
        %v481 = vsel %vm479, %v474, 0
        %483 = vmatprep.subr.mxu0 0.0
        %484 = vmatpush1.msra.mxu0 0.0
        %485 = vmatprep.subr.mxu0 0.0
        %486 = vmatpush1.msra.mxu0 0.0
        %487 = vmatprep.subr.mxu0 0.0
        %488 = vmatpush1.msra.mxu0 0.0
        %489 = vmatprep.subr.mxu0 0.0
        %490 = vmatpush1.msra.mxu0 0.0
        %491 = vmatprep.subr.mxu0 0.0
        %492 = vmatpush1.msra.mxu0 0.0
        %493 = vmatprep.subr.mxu0 0.0
        %494 = vmatpush1.msra.mxu0 0.0
        %495 = vmatprep.subr.mxu0 0.0
        %496 = vmatpush1.msra.mxu0 0.0
        %497 = vmatprep.subr.mxu0 0.0
        %498 = vmatpush1.msra.mxu0 0.0
        %499 = vmatprep.subr.mxu0 0.0
        %500 = vmatpush1.msra.mxu0 0.0
        %501 = vmatprep.subr.mxu0 0.0
        %502 = vmatpush1.msra.mxu0 0.0
        %503 = vmatprep.subr.mxu0 0.0
        %504 = vmatpush1.msra.mxu0 0.0
        %505 = vmatprep.subr.mxu0 0.0
        %506 = vmatpush1.msra.mxu0 0.0
        %507 = vmatprep.subr.mxu0 0.0
        %508 = vmatpush1.msra.mxu0 %v478
        %509 = vmatprep.subr.mxu0 0.0
        %510 = vmatpush1.msra.mxu0 %v477
        %511 = vmatprep.subr.mxu0 0.0
        %512 = vmatpush1.msra.mxu0 %v476
        %513 = vmatprep.subr.mxu0 0.0
        %514 = vmatpush1.msra.mxu0 %v475
        %515 = vmatprep.subr.mxu0 0.0
        %516 = vmatpush2.msra.mxu0 0.0
        %517 = vmatprep.subr.mxu0 0.0
        %518 = vmatpush2.msra.mxu0 0.0
        %519 = vmatprep.subr.mxu0 0.0
        %520 = vmatpush2.msra.mxu0 0.0
        %521 = vmatprep.subr.mxu0 0.0
        %522 = vmatpush2.msra.mxu0 0.0
        %523 = vmatprep.subr.mxu0 0.0
        %524 = vmatpush2.msra.mxu0 0.0
        %525 = vmatprep.subr.mxu0 0.0
        %526 = vmatpush2.msra.mxu0 0.0
        %527 = vmatprep.subr.mxu0 0.0
        %528 = vmatpush2.msra.mxu0 0.0
        %529 = vmatprep.subr.mxu0 0.0
        %530 = vmatpush2.msra.mxu0 0.0
        %531 = vmatprep.subr.mxu0 0.0
        %532 = vmatpush2.msra.mxu0 0.0
        %533 = vmatprep.subr.mxu0 0.0
        %534 = vmatpush2.msra.mxu0 0.0
        %535 = vmatprep.subr.mxu0 0.0
        %536 = vmatpush2.msra.mxu0 0.0
        %537 = vmatprep.subr.mxu0 0.0
        %538 = vmatpush2.msra.mxu0 0.0
        %539 = vmatprep.subr.mxu0 0.0
        %540 = vmatpush2.msra.mxu0 0.0
        %541 = vmatprep.subr.mxu0 0.0
        %542 = vmatpush2.msra.mxu0 0.0
        %543 = vmatprep.subr.mxu0 0.0
        %544 = vmatpush2.msra.mxu0 0.0
        %545 = vmatprep.subr.mxu0 0.0
        %546 = vmatpush2.msra.mxu0 0.0
        %547 = vmatprep.mubr.f32.mxu0 0.0
        %548 = vmatmul.mubr.f32.gmra.mxu0 %v481
        %v549 = vpop.f32.mrf.mxu0
        %v550 = vadd.f32 0.0, %v549
        %v551 = vpop.f32.mrf.mxu0
        %552 = vdwg.mxu0
        %v553 = vmul.f32 %v550, 0.35355338
        %v554 = vld [vmem:[#allocation2] sm:$0xff]
        %vm555 = vcmask 64512
        %v557 = vsel %vm555, %v553, 0
        %v560 = vsel %vm555, %v554, 0
        %562 = vmatprep.subr.mxu0 0.0
        %563 = vmatpush1.xpose.msra.mxu0 0.0
        %564 = vmatprep.subr.mxu0 0.0
        %565 = vmatpush1.xpose.msra.mxu0 0.0
        %566 = vmatprep.subr.mxu0 0.0
        %567 = vmatpush1.xpose.msra.mxu0 0.0
        %568 = vmatprep.subr.mxu0 0.0
        %569 = vmatpush1.xpose.msra.mxu0 0.0
        %570 = vmatprep.subr.mxu0 0.0
        %571 = vmatpush1.xpose.msra.mxu0 0.0
        %572 = vmatprep.subr.mxu0 0.0
        %573 = vmatpush1.xpose.msra.mxu0 0.0
        %574 = vmatprep.subr.mxu0 0.0
        %575 = vmatpush1.xpose.msra.mxu0 0.0
        %576 = vmatprep.subr.mxu0 0.0
        %577 = vmatpush1.xpose.msra.mxu0 0.0
        %578 = vmatprep.subr.mxu0 0.0
        %579 = vmatpush1.xpose.msra.mxu0 0.0
        %580 = vmatprep.subr.mxu0 0.0
        %581 = vmatpush1.xpose.msra.mxu0 0.0
        %582 = vmatprep.subr.mxu0 0.0
        %583 = vmatpush1.xpose.msra.mxu0 0.0
        %584 = vmatprep.subr.mxu0 0.0
        %585 = vmatpush1.xpose.msra.mxu0 0.0
        %586 = vmatprep.subr.mxu0 0.0
        %587 = vmatpush1.xpose.msra.mxu0 0.0
        %588 = vmatprep.subr.mxu0 0.0
        %589 = vmatpush1.xpose.msra.mxu0 0.0
        %590 = vmatprep.subr.mxu0 0.0
        %591 = vmatpush1.xpose.msra.mxu0 0.0
        %592 = vmatprep.subr.mxu0 0.0
        %593 = vmatpush1.xpose.msra.mxu0 %v560
        %594 = vmatprep.subr.mxu0 0.0
        %595 = vmatpush2.xpose.msra.mxu0 0.0
        %596 = vmatprep.subr.mxu0 0.0
        %597 = vmatpush2.xpose.msra.mxu0 0.0
        %598 = vmatprep.subr.mxu0 0.0
        %599 = vmatpush2.xpose.msra.mxu0 0.0
        %600 = vmatprep.subr.mxu0 0.0
        %601 = vmatpush2.xpose.msra.mxu0 0.0
        %602 = vmatprep.subr.mxu0 0.0
        %603 = vmatpush2.xpose.msra.mxu0 0.0
        %604 = vmatprep.subr.mxu0 0.0
        %605 = vmatpush2.xpose.msra.mxu0 0.0
        %606 = vmatprep.subr.mxu0 0.0
        %607 = vmatpush2.xpose.msra.mxu0 0.0
        %608 = vmatprep.subr.mxu0 0.0
        %609 = vmatpush2.xpose.msra.mxu0 0.0
        %610 = vmatprep.subr.mxu0 0.0
        %611 = vmatpush2.xpose.msra.mxu0 0.0
        %612 = vmatprep.subr.mxu0 0.0
        %613 = vmatpush2.xpose.msra.mxu0 0.0
        %614 = vmatprep.subr.mxu0 0.0
        %615 = vmatpush2.xpose.msra.mxu0 0.0
        %616 = vmatprep.subr.mxu0 0.0
        %617 = vmatpush2.xpose.msra.mxu0 0.0
        %618 = vmatprep.subr.mxu0 0.0
        %619 = vmatpush2.xpose.msra.mxu0 0.0
        %620 = vmatprep.subr.mxu0 0.0
        %621 = vmatpush2.xpose.msra.mxu0 0.0
        %622 = vmatprep.subr.mxu0 0.0
        %623 = vmatpush2.xpose.msra.mxu0 0.0
        %624 = vmatprep.subr.mxu0 0.0
        %625 = vmatpush2.xpose.msra.mxu0 0.0
        %626 = vmatprep.mubr.f32.mxu0 0.0
        %627 = vmatmul.mubr.f32.gmra.mxu0 %v557
        %v628 = vpop.f32.mrf.mxu0
        %v629 = vadd.f32 0.0, %v628
        %v630 = vpop.f32.mrf.mxu0
        %631 = vdwg.mxu0
        %v632 = vsel %vm555, %v629, -inf
        %633 = vmax.xlane.f32.xlu0 %v632
        %v634 = vpop.xlane.xlu0 %633
        %v635 = vsub.f32 %v629, %v634
        %v636 = vmul.f32 %v635, 1.442695
        %v637 = vpow.pop %v636
        %v638 = vsel %vm555, %v637, 0.0
        %639 = vadd.xlane.f32.xlu0 %v638
        %v640 = vpop.xlane.xlu0 %639
        %v641 = vrcp.pop %v640
        %v642 = vmul.f32 %v637, %v641
        %v643 = vld [vmem:[#allocation3] sm:$0xff]
        %v645 = vsel %vm555, %v642, 0
        %647 = vmatprep.subr.mxu0 0.0
        %648 = vmatpush1.msra.mxu0 0.0
        %649 = vmatprep.subr.mxu0 0.0
        %650 = vmatpush1.msra.mxu0 0.0
        %651 = vmatprep.subr.mxu0 0.0
        %652 = vmatpush1.msra.mxu0 0.0
        %653 = vmatprep.subr.mxu0 0.0
        %654 = vmatpush1.msra.mxu0 0.0
        %655 = vmatprep.subr.mxu0 0.0
        %656 = vmatpush1.msra.mxu0 0.0
        %657 = vmatprep.subr.mxu0 0.0
        %658 = vmatpush1.msra.mxu0 0.0
        %659 = vmatprep.subr.mxu0 0.0
        %660 = vmatpush1.msra.mxu0 0.0
        %661 = vmatprep.subr.mxu0 0.0
        %662 = vmatpush1.msra.mxu0 0.0
        %663 = vmatprep.subr.mxu0 0.0
        %664 = vmatpush1.msra.mxu0 0.0
        %665 = vmatprep.subr.mxu0 0.0
        %666 = vmatpush1.msra.mxu0 0.0
        %667 = vmatprep.subr.mxu0 0.0
        %668 = vmatpush1.msra.mxu0 0.0
        %669 = vmatprep.subr.mxu0 0.0
        %670 = vmatpush1.msra.mxu0 0.0
        %671 = vmatprep.subr.mxu0 0.0
        %672 = vmatpush1.msra.mxu0 0.0
        %673 = vmatprep.subr.mxu0 0.0
        %674 = vmatpush1.msra.mxu0 0.0
        %675 = vmatprep.subr.mxu0 0.0
        %676 = vmatpush1.msra.mxu0 0.0
        %677 = vmatprep.subr.mxu0 0.0
        %678 = vmatpush1.msra.mxu0 %v643
        %679 = vmatprep.subr.mxu0 0.0
        %680 = vmatpush2.msra.mxu0 0.0
        %681 = vmatprep.subr.mxu0 0.0
        %682 = vmatpush2.msra.mxu0 0.0
        %683 = vmatprep.subr.mxu0 0.0
        %684 = vmatpush2.msra.mxu0 0.0
        %685 = vmatprep.subr.mxu0 0.0
        %686 = vmatpush2.msra.mxu0 0.0
        %687 = vmatprep.subr.mxu0 0.0
        %688 = vmatpush2.msra.mxu0 0.0
        %689 = vmatprep.subr.mxu0 0.0
        %690 = vmatpush2.msra.mxu0 0.0
        %691 = vmatprep.subr.mxu0 0.0
        %692 = vmatpush2.msra.mxu0 0.0
        %693 = vmatprep.subr.mxu0 0.0
        %694 = vmatpush2.msra.mxu0 0.0
        %695 = vmatprep.subr.mxu0 0.0
        %696 = vmatpush2.msra.mxu0 0.0
        %697 = vmatprep.subr.mxu0 0.0
        %698 = vmatpush2.msra.mxu0 0.0
        %699 = vmatprep.subr.mxu0 0.0
        %700 = vmatpush2.msra.mxu0 0.0
        %701 = vmatprep.subr.mxu0 0.0
        %702 = vmatpush2.msra.mxu0 0.0
        %703 = vmatprep.subr.mxu0 0.0
        %704 = vmatpush2.msra.mxu0 0.0
        %705 = vmatprep.subr.mxu0 0.0
        %706 = vmatpush2.msra.mxu0 0.0
        %707 = vmatprep.subr.mxu0 0.0
        %708 = vmatpush2.msra.mxu0 0.0
        %709 = vmatprep.subr.mxu0 0.0
        %710 = vmatpush2.msra.mxu0 0.0
        %711 = vmatprep.mubr.f32.mxu0 0.0
        %712 = vmatmul.mubr.f32.gmra.mxu0 %v645
        %v713 = vpop.f32.mrf.mxu0
        %v714 = vadd.f32 0.0, %v713
        %v715 = vpop.f32.mrf.mxu0
        %716 = vdwg.mxu0
        %v717 = vld [vmem:[#allocation9] sm:$0xff]
        %s718 = scalar_lea.vmem [#allocation2], 8
        %v719 = vld [vmem:[%s718] sm:$0xff]
        %720 = vrot.lane.b32.xlu0 %v553, 120
        %v721 = vpop.permute.xlu0 %720
        %v722 = vsel %vm555, %v721, 0
        %v725 = vsel %vm555, %v719, 0
        %727 = vmatprep.subr.mxu0 0.0
        %728 = vmatpush1.xpose.msra.mxu0 0.0
        %729 = vmatprep.subr.mxu0 0.0
        %730 = vmatpush1.xpose.msra.mxu0 0.0
        %731 = vmatprep.subr.mxu0 0.0
        %732 = vmatpush1.xpose.msra.mxu0 0.0
        %733 = vmatprep.subr.mxu0 0.0
        %734 = vmatpush1.xpose.msra.mxu0 0.0
        %735 = vmatprep.subr.mxu0 0.0
        %736 = vmatpush1.xpose.msra.mxu0 0.0
        %737 = vmatprep.subr.mxu0 0.0
        %738 = vmatpush1.xpose.msra.mxu0 0.0
        %739 = vmatprep.subr.mxu0 0.0
        %740 = vmatpush1.xpose.msra.mxu0 0.0
        %741 = vmatprep.subr.mxu0 0.0
        %742 = vmatpush1.xpose.msra.mxu0 0.0
        %743 = vmatprep.subr.mxu0 0.0
        %744 = vmatpush1.xpose.msra.mxu0 0.0
        %745 = vmatprep.subr.mxu0 0.0
        %746 = vmatpush1.xpose.msra.mxu0 0.0
        %747 = vmatprep.subr.mxu0 0.0
        %748 = vmatpush1.xpose.msra.mxu0 0.0
        %749 = vmatprep.subr.mxu0 0.0
        %750 = vmatpush1.xpose.msra.mxu0 0.0
        %751 = vmatprep.subr.mxu0 0.0
        %752 = vmatpush1.xpose.msra.mxu0 0.0
        %753 = vmatprep.subr.mxu0 0.0
        %754 = vmatpush1.xpose.msra.mxu0 0.0
        %755 = vmatprep.subr.mxu0 0.0
        %756 = vmatpush1.xpose.msra.mxu0 0.0
        %757 = vmatprep.subr.mxu0 0.0
        %758 = vmatpush1.xpose.msra.mxu0 %v725
        %759 = vmatprep.subr.mxu0 0.0
        %760 = vmatpush2.xpose.msra.mxu0 0.0
        %761 = vmatprep.subr.mxu0 0.0
        %762 = vmatpush2.xpose.msra.mxu0 0.0
        %763 = vmatprep.subr.mxu0 0.0
        %764 = vmatpush2.xpose.msra.mxu0 0.0
        %765 = vmatprep.subr.mxu0 0.0
        %766 = vmatpush2.xpose.msra.mxu0 0.0
        %767 = vmatprep.subr.mxu0 0.0
        %768 = vmatpush2.xpose.msra.mxu0 0.0
        %769 = vmatprep.subr.mxu0 0.0
        %770 = vmatpush2.xpose.msra.mxu0 0.0
        %771 = vmatprep.subr.mxu0 0.0
        %772 = vmatpush2.xpose.msra.mxu0 0.0
        %773 = vmatprep.subr.mxu0 0.0
        %774 = vmatpush2.xpose.msra.mxu0 0.0
        %775 = vmatprep.subr.mxu0 0.0
        %776 = vmatpush2.xpose.msra.mxu0 0.0
        %777 = vmatprep.subr.mxu0 0.0
        %778 = vmatpush2.xpose.msra.mxu0 0.0
        %779 = vmatprep.subr.mxu0 0.0
        %780 = vmatpush2.xpose.msra.mxu0 0.0
        %781 = vmatprep.subr.mxu0 0.0
        %782 = vmatpush2.xpose.msra.mxu0 0.0
        %783 = vmatprep.subr.mxu0 0.0
        %784 = vmatpush2.xpose.msra.mxu0 0.0
        %785 = vmatprep.subr.mxu0 0.0
        %786 = vmatpush2.xpose.msra.mxu0 0.0
        %787 = vmatprep.subr.mxu0 0.0
        %788 = vmatpush2.xpose.msra.mxu0 0.0
        %789 = vmatprep.subr.mxu0 0.0
        %790 = vmatpush2.xpose.msra.mxu0 0.0
        %791 = vmatprep.mubr.f32.mxu0 0.0
        %792 = vmatmul.mubr.f32.gmra.mxu0 %v722
        %v793 = vpop.f32.mrf.mxu0
        %v794 = vadd.f32 0.0, %v793
        %v795 = vpop.f32.mrf.mxu0
        %796 = vdwg.mxu0
        %v797 = vsel %vm555, %v794, -inf
        %798 = vmax.xlane.f32.xlu0 %v797
        %v799 = vpop.xlane.xlu0 %798
        %v800 = vsub.f32 %v794, %v799
        %v801 = vmul.f32 %v800, 1.442695
        %v802 = vpow.pop %v801
        %v803 = vsel %vm555, %v802, 0.0
        %804 = vadd.xlane.f32.xlu0 %v803
        %v805 = vpop.xlane.xlu0 %804
        %v806 = vrcp.pop %v805
        %v807 = vmul.f32 %v802, %v806
        %s808 = scalar_lea.vmem [#allocation3], 8
        %v809 = vld [vmem:[%s808] sm:$0xff]
        %v811 = vsel %vm555, %v807, 0
        %813 = vmatprep.subr.mxu0 0.0
        %814 = vmatpush1.msra.mxu0 0.0
        %815 = vmatprep.subr.mxu0 0.0
        %816 = vmatpush1.msra.mxu0 0.0
        %817 = vmatprep.subr.mxu0 0.0
        %818 = vmatpush1.msra.mxu0 0.0
        %819 = vmatprep.subr.mxu0 0.0
        %820 = vmatpush1.msra.mxu0 0.0
        %821 = vmatprep.subr.mxu0 0.0
        %822 = vmatpush1.msra.mxu0 0.0
        %823 = vmatprep.subr.mxu0 0.0
        %824 = vmatpush1.msra.mxu0 0.0
        %825 = vmatprep.subr.mxu0 0.0
        %826 = vmatpush1.msra.mxu0 0.0
        %827 = vmatprep.subr.mxu0 0.0
        %828 = vmatpush1.msra.mxu0 0.0
        %829 = vmatprep.subr.mxu0 0.0
        %830 = vmatpush1.msra.mxu0 0.0
        %831 = vmatprep.subr.mxu0 0.0
        %832 = vmatpush1.msra.mxu0 0.0
        %833 = vmatprep.subr.mxu0 0.0
        %834 = vmatpush1.msra.mxu0 0.0
        %835 = vmatprep.subr.mxu0 0.0
        %836 = vmatpush1.msra.mxu0 0.0
        %837 = vmatprep.subr.mxu0 0.0
        %838 = vmatpush1.msra.mxu0 0.0
        %839 = vmatprep.subr.mxu0 0.0
        %840 = vmatpush1.msra.mxu0 0.0
        %841 = vmatprep.subr.mxu0 0.0
        %842 = vmatpush1.msra.mxu0 0.0
        %843 = vmatprep.subr.mxu0 0.0
        %844 = vmatpush1.msra.mxu0 %v809
        %845 = vmatprep.subr.mxu0 0.0
        %846 = vmatpush2.msra.mxu0 0.0
        %847 = vmatprep.subr.mxu0 0.0
        %848 = vmatpush2.msra.mxu0 0.0
        %849 = vmatprep.subr.mxu0 0.0
        %850 = vmatpush2.msra.mxu0 0.0
        %851 = vmatprep.subr.mxu0 0.0
        %852 = vmatpush2.msra.mxu0 0.0
        %853 = vmatprep.subr.mxu0 0.0
        %854 = vmatpush2.msra.mxu0 0.0
        %855 = vmatprep.subr.mxu0 0.0
        %856 = vmatpush2.msra.mxu0 0.0
        %857 = vmatprep.subr.mxu0 0.0
        %858 = vmatpush2.msra.mxu0 0.0
        %859 = vmatprep.subr.mxu0 0.0
        %860 = vmatpush2.msra.mxu0 0.0
        %861 = vmatprep.subr.mxu0 0.0
        %862 = vmatpush2.msra.mxu0 0.0
        %863 = vmatprep.subr.mxu0 0.0
        %864 = vmatpush2.msra.mxu0 0.0
        %865 = vmatprep.subr.mxu0 0.0
        %866 = vmatpush2.msra.mxu0 0.0
        %867 = vmatprep.subr.mxu0 0.0
        %868 = vmatpush2.msra.mxu0 0.0
        %869 = vmatprep.subr.mxu0 0.0
        %870 = vmatpush2.msra.mxu0 0.0
        %871 = vmatprep.subr.mxu0 0.0
        %872 = vmatpush2.msra.mxu0 0.0
        %873 = vmatprep.subr.mxu0 0.0
        %874 = vmatpush2.msra.mxu0 0.0
        %875 = vmatprep.subr.mxu0 0.0
        %876 = vmatpush2.msra.mxu0 0.0
        %877 = vmatprep.mubr.f32.mxu0 0.0
        %878 = vmatmul.mubr.f32.gmra.mxu0 %v811
        %v879 = vpop.f32.mrf.mxu0
        %v880 = vadd.f32 0.0, %v879
        %v881 = vpop.f32.mrf.mxu0
        %882 = vdwg.mxu0
        %v883 = vld [vmem:[#allocation9 + $0x8] sm:$0xff]
        %v885 = vsel %vm555, %v880, 0
        %887 = vmatprep.subr.mxu0 0.0
        %888 = vmatpush1.msra.mxu0 0.0
        %889 = vmatprep.subr.mxu0 0.0
        %890 = vmatpush1.msra.mxu0 0.0
        %891 = vmatprep.subr.mxu0 0.0
        %892 = vmatpush1.msra.mxu0 0.0
        %893 = vmatprep.subr.mxu0 0.0
        %894 = vmatpush1.msra.mxu0 0.0
        %895 = vmatprep.subr.mxu0 0.0
        %896 = vmatpush1.msra.mxu0 0.0
        %897 = vmatprep.subr.mxu0 0.0
        %898 = vmatpush1.msra.mxu0 0.0
        %899 = vmatprep.subr.mxu0 0.0
        %900 = vmatpush1.msra.mxu0 0.0
        %901 = vmatprep.subr.mxu0 0.0
        %902 = vmatpush1.msra.mxu0 0.0
        %903 = vmatprep.subr.mxu0 0.0
        %904 = vmatpush1.msra.mxu0 0.0
        %905 = vmatprep.subr.mxu0 0.0
        %906 = vmatpush1.msra.mxu0 0.0
        %907 = vmatprep.subr.mxu0 0.0
        %908 = vmatpush1.msra.mxu0 0.0
        %909 = vmatprep.subr.mxu0 0.0
        %910 = vmatpush1.msra.mxu0 0.0
        %911 = vmatprep.subr.mxu0 0.0
        %912 = vmatpush1.msra.mxu0 0.0
        %913 = vmatprep.subr.mxu0 0.0
        %914 = vmatpush1.msra.mxu0 0.0
        %915 = vmatprep.subr.mxu0 0.0
        %916 = vmatpush1.msra.mxu0 0.0
        %917 = vmatprep.subr.mxu0 0.0
        %918 = vmatpush1.msra.mxu0 %v883
        %919 = vmatprep.subr.mxu0 0.0
        %920 = vmatpush2.msra.mxu0 0.0
        %921 = vmatprep.subr.mxu0 0.0
        %922 = vmatpush2.msra.mxu0 0.0
        %923 = vmatprep.subr.mxu0 0.0
        %924 = vmatpush2.msra.mxu0 0.0
        %925 = vmatprep.subr.mxu0 0.0
        %926 = vmatpush2.msra.mxu0 0.0
        %927 = vmatprep.subr.mxu0 0.0
        %928 = vmatpush2.msra.mxu0 0.0
        %929 = vmatprep.subr.mxu0 0.0
        %930 = vmatpush2.msra.mxu0 0.0
        %931 = vmatprep.subr.mxu0 0.0
        %932 = vmatpush2.msra.mxu0 0.0
        %933 = vmatprep.subr.mxu0 0.0
        %934 = vmatpush2.msra.mxu0 0.0
        %935 = vmatprep.subr.mxu0 0.0
        %936 = vmatpush2.msra.mxu0 0.0
        %937 = vmatprep.subr.mxu0 0.0
        %938 = vmatpush2.msra.mxu0 0.0
        %939 = vmatprep.subr.mxu0 0.0
        %940 = vmatpush2.msra.mxu0 0.0
        %941 = vmatprep.subr.mxu0 0.0
        %942 = vmatpush2.msra.mxu0 0.0
        %943 = vmatprep.subr.mxu0 0.0
        %944 = vmatpush2.msra.mxu0 0.0
        %945 = vmatprep.subr.mxu0 0.0
        %946 = vmatpush2.msra.mxu0 0.0
        %947 = vmatprep.subr.mxu0 0.0
        %948 = vmatpush2.msra.mxu0 0.0
        %949 = vmatprep.subr.mxu0 0.0
        %950 = vmatpush2.msra.mxu0 0.0
        %951 = vmatprep.mubr.f32.mxu0 0.0
        %952 = vmatmul.mubr.f32.gmra.mxu0 %v885
        %v953 = vpop.f32.mrf.mxu0
        %v954 = vadd.f32 0.0, %v953
        %v955 = vpop.f32.mrf.mxu0
        %956 = vdwg.mxu0
        %v958 = vsel %vm555, %v714, 0
        %960 = vmatprep.subr.mxu0 0.0
        %961 = vmatpush1.msra.mxu0 0.0
        %962 = vmatprep.subr.mxu0 0.0
        %963 = vmatpush1.msra.mxu0 0.0
        %964 = vmatprep.subr.mxu0 0.0
        %965 = vmatpush1.msra.mxu0 0.0
        %966 = vmatprep.subr.mxu0 0.0
        %967 = vmatpush1.msra.mxu0 0.0
        %968 = vmatprep.subr.mxu0 0.0
        %969 = vmatpush1.msra.mxu0 0.0
        %970 = vmatprep.subr.mxu0 0.0
        %971 = vmatpush1.msra.mxu0 0.0
        %972 = vmatprep.subr.mxu0 0.0
        %973 = vmatpush1.msra.mxu0 0.0
        %974 = vmatprep.subr.mxu0 0.0
        %975 = vmatpush1.msra.mxu0 0.0
        %976 = vmatprep.subr.mxu0 0.0
        %977 = vmatpush1.msra.mxu0 0.0
        %978 = vmatprep.subr.mxu0 0.0
        %979 = vmatpush1.msra.mxu0 0.0
        %980 = vmatprep.subr.mxu0 0.0
        %981 = vmatpush1.msra.mxu0 0.0
        %982 = vmatprep.subr.mxu0 0.0
        %983 = vmatpush1.msra.mxu0 0.0
        %984 = vmatprep.subr.mxu0 0.0
        %985 = vmatpush1.msra.mxu0 0.0
        %986 = vmatprep.subr.mxu0 0.0
        %987 = vmatpush1.msra.mxu0 0.0
        %988 = vmatprep.subr.mxu0 0.0
        %989 = vmatpush1.msra.mxu0 0.0
        %990 = vmatprep.subr.mxu0 0.0
        %991 = vmatpush1.msra.mxu0 %v717
        %992 = vmatprep.subr.mxu0 0.0
        %993 = vmatpush2.msra.mxu0 0.0
        %994 = vmatprep.subr.mxu0 0.0
        %995 = vmatpush2.msra.mxu0 0.0
        %996 = vmatprep.subr.mxu0 0.0
        %997 = vmatpush2.msra.mxu0 0.0
        %998 = vmatprep.subr.mxu0 0.0
        %999 = vmatpush2.msra.mxu0 0.0
        %1000 = vmatprep.subr.mxu0 0.0
        %1001 = vmatpush2.msra.mxu0 0.0
        %1002 = vmatprep.subr.mxu0 0.0
        %1003 = vmatpush2.msra.mxu0 0.0
        %1004 = vmatprep.subr.mxu0 0.0
        %1005 = vmatpush2.msra.mxu0 0.0
        %1006 = vmatprep.subr.mxu0 0.0
        %1007 = vmatpush2.msra.mxu0 0.0
        %1008 = vmatprep.subr.mxu0 0.0
        %1009 = vmatpush2.msra.mxu0 0.0
        %1010 = vmatprep.subr.mxu0 0.0
        %1011 = vmatpush2.msra.mxu0 0.0
        %1012 = vmatprep.subr.mxu0 0.0
        %1013 = vmatpush2.msra.mxu0 0.0
        %1014 = vmatprep.subr.mxu0 0.0
        %1015 = vmatpush2.msra.mxu0 0.0
        %1016 = vmatprep.subr.mxu0 0.0
        %1017 = vmatpush2.msra.mxu0 0.0
        %1018 = vmatprep.subr.mxu0 0.0
        %1019 = vmatpush2.msra.mxu0 0.0
        %1020 = vmatprep.subr.mxu0 0.0
        %1021 = vmatpush2.msra.mxu0 0.0
        %1022 = vmatprep.subr.mxu0 0.0
        %1023 = vmatpush2.msra.mxu0 0.0
        %1024 = vmatprep.mubr.f32.mxu0 0.0
        %1025 = vmatmul.mubr.f32.gmra.mxu0 %v958
        %v1026 = vpop.f32.mrf.mxu0
        %v1027 = vadd.f32 %v954, %v1026
        %v1028 = vpop.f32.mrf.mxu0
        %1029 = vdwg.mxu0
        %s1030 = scalar_lea.vmem [#allocation2], 16
        %v1031 = vld [vmem:[%s1030] sm:$0xff]
        %1032 = vrot.lane.b32.xlu0 %v553, 112
        %v1033 = vpop.permute.xlu0 %1032
        %v1034 = vsel %vm555, %v1033, 0
        %v1037 = vsel %vm555, %v1031, 0
        %1039 = vmatprep.subr.mxu0 0.0
        %1040 = vmatpush1.xpose.msra.mxu0 0.0
        %1041 = vmatprep.subr.mxu0 0.0
        %1042 = vmatpush1.xpose.msra.mxu0 0.0
        %1043 = vmatprep.subr.mxu0 0.0
        %1044 = vmatpush1.xpose.msra.mxu0 0.0
        %1045 = vmatprep.subr.mxu0 0.0
        %1046 = vmatpush1.xpose.msra.mxu0 0.0
        %1047 = vmatprep.subr.mxu0 0.0
        %1048 = vmatpush1.xpose.msra.mxu0 0.0
        %1049 = vmatprep.subr.mxu0 0.0
        %1050 = vmatpush1.xpose.msra.mxu0 0.0
        %1051 = vmatprep.subr.mxu0 0.0
        %1052 = vmatpush1.xpose.msra.mxu0 0.0
        %1053 = vmatprep.subr.mxu0 0.0
        %1054 = vmatpush1.xpose.msra.mxu0 0.0
        %1055 = vmatprep.subr.mxu0 0.0
        %1056 = vmatpush1.xpose.msra.mxu0 0.0
        %1057 = vmatprep.subr.mxu0 0.0
        %1058 = vmatpush1.xpose.msra.mxu0 0.0
        %1059 = vmatprep.subr.mxu0 0.0
        %1060 = vmatpush1.xpose.msra.mxu0 0.0
        %1061 = vmatprep.subr.mxu0 0.0
        %1062 = vmatpush1.xpose.msra.mxu0 0.0
        %1063 = vmatprep.subr.mxu0 0.0
        %1064 = vmatpush1.xpose.msra.mxu0 0.0
        %1065 = vmatprep.subr.mxu0 0.0
        %1066 = vmatpush1.xpose.msra.mxu0 0.0
        %1067 = vmatprep.subr.mxu0 0.0
        %1068 = vmatpush1.xpose.msra.mxu0 0.0
        %1069 = vmatprep.subr.mxu0 0.0
        %1070 = vmatpush1.xpose.msra.mxu0 %v1037
        %1071 = vmatprep.subr.mxu0 0.0
        %1072 = vmatpush2.xpose.msra.mxu0 0.0
        %1073 = vmatprep.subr.mxu0 0.0
        %1074 = vmatpush2.xpose.msra.mxu0 0.0
        %1075 = vmatprep.subr.mxu0 0.0
        %1076 = vmatpush2.xpose.msra.mxu0 0.0
        %1077 = vmatprep.subr.mxu0 0.0
        %1078 = vmatpush2.xpose.msra.mxu0 0.0
        %1079 = vmatprep.subr.mxu0 0.0
        %1080 = vmatpush2.xpose.msra.mxu0 0.0
        %1081 = vmatprep.subr.mxu0 0.0
        %1082 = vmatpush2.xpose.msra.mxu0 0.0
        %1083 = vmatprep.subr.mxu0 0.0
        %1084 = vmatpush2.xpose.msra.mxu0 0.0
        %1085 = vmatprep.subr.mxu0 0.0
        %1086 = vmatpush2.xpose.msra.mxu0 0.0
        %1087 = vmatprep.subr.mxu0 0.0
        %1088 = vmatpush2.xpose.msra.mxu0 0.0
        %1089 = vmatprep.subr.mxu0 0.0
        %1090 = vmatpush2.xpose.msra.mxu0 0.0
        %1091 = vmatprep.subr.mxu0 0.0
        %1092 = vmatpush2.xpose.msra.mxu0 0.0
        %1093 = vmatprep.subr.mxu0 0.0
        %1094 = vmatpush2.xpose.msra.mxu0 0.0
        %1095 = vmatprep.subr.mxu0 0.0
        %1096 = vmatpush2.xpose.msra.mxu0 0.0
        %1097 = vmatprep.subr.mxu0 0.0
        %1098 = vmatpush2.xpose.msra.mxu0 0.0
        %1099 = vmatprep.subr.mxu0 0.0
        %1100 = vmatpush2.xpose.msra.mxu0 0.0
        %1101 = vmatprep.subr.mxu0 0.0
        %1102 = vmatpush2.xpose.msra.mxu0 0.0
        %1103 = vmatprep.mubr.f32.mxu0 0.0
        %1104 = vmatmul.mubr.f32.gmra.mxu0 %v1034
        %v1105 = vpop.f32.mrf.mxu0
        %v1106 = vadd.f32 0.0, %v1105
        %v1107 = vpop.f32.mrf.mxu0
        %1108 = vdwg.mxu0
        %v1109 = vsel %vm555, %v1106, -inf
        %1110 = vmax.xlane.f32.xlu0 %v1109
        %v1111 = vpop.xlane.xlu0 %1110
        %v1112 = vsub.f32 %v1106, %v1111
        %v1113 = vmul.f32 %v1112, 1.442695
        %v1114 = vpow.pop %v1113
        %v1115 = vsel %vm555, %v1114, 0.0
        %1116 = vadd.xlane.f32.xlu0 %v1115
        %v1117 = vpop.xlane.xlu0 %1116
        %v1118 = vrcp.pop %v1117
        %v1119 = vmul.f32 %v1114, %v1118
        %s1120 = scalar_lea.vmem [#allocation3], 16
        %v1121 = vld [vmem:[%s1120] sm:$0xff]
        %v1123 = vsel %vm555, %v1119, 0
        %1125 = vmatprep.subr.mxu0 0.0
        %1126 = vmatpush1.msra.mxu0 0.0
        %1127 = vmatprep.subr.mxu0 0.0
        %1128 = vmatpush1.msra.mxu0 0.0
        %1129 = vmatprep.subr.mxu0 0.0
        %1130 = vmatpush1.msra.mxu0 0.0
        %1131 = vmatprep.subr.mxu0 0.0
        %1132 = vmatpush1.msra.mxu0 0.0
        %1133 = vmatprep.subr.mxu0 0.0
        %1134 = vmatpush1.msra.mxu0 0.0
        %1135 = vmatprep.subr.mxu0 0.0
        %1136 = vmatpush1.msra.mxu0 0.0
        %1137 = vmatprep.subr.mxu0 0.0
        %1138 = vmatpush1.msra.mxu0 0.0
        %1139 = vmatprep.subr.mxu0 0.0
        %1140 = vmatpush1.msra.mxu0 0.0
        %1141 = vmatprep.subr.mxu0 0.0
        %1142 = vmatpush1.msra.mxu0 0.0
        %1143 = vmatprep.subr.mxu0 0.0
        %1144 = vmatpush1.msra.mxu0 0.0
        %1145 = vmatprep.subr.mxu0 0.0
        %1146 = vmatpush1.msra.mxu0 0.0
        %1147 = vmatprep.subr.mxu0 0.0
        %1148 = vmatpush1.msra.mxu0 0.0
        %1149 = vmatprep.subr.mxu0 0.0
        %1150 = vmatpush1.msra.mxu0 0.0
        %1151 = vmatprep.subr.mxu0 0.0
        %1152 = vmatpush1.msra.mxu0 0.0
        %1153 = vmatprep.subr.mxu0 0.0
        %1154 = vmatpush1.msra.mxu0 0.0
        %1155 = vmatprep.subr.mxu0 0.0
        %1156 = vmatpush1.msra.mxu0 %v1121
        %1157 = vmatprep.subr.mxu0 0.0
        %1158 = vmatpush2.msra.mxu0 0.0
        %1159 = vmatprep.subr.mxu0 0.0
        %1160 = vmatpush2.msra.mxu0 0.0
        %1161 = vmatprep.subr.mxu0 0.0
        %1162 = vmatpush2.msra.mxu0 0.0
        %1163 = vmatprep.subr.mxu0 0.0
        %1164 = vmatpush2.msra.mxu0 0.0
        %1165 = vmatprep.subr.mxu0 0.0
        %1166 = vmatpush2.msra.mxu0 0.0
        %1167 = vmatprep.subr.mxu0 0.0
        %1168 = vmatpush2.msra.mxu0 0.0
        %1169 = vmatprep.subr.mxu0 0.0
        %1170 = vmatpush2.msra.mxu0 0.0
        %1171 = vmatprep.subr.mxu0 0.0
        %1172 = vmatpush2.msra.mxu0 0.0
        %1173 = vmatprep.subr.mxu0 0.0
        %1174 = vmatpush2.msra.mxu0 0.0
        %1175 = vmatprep.subr.mxu0 0.0
        %1176 = vmatpush2.msra.mxu0 0.0
        %1177 = vmatprep.subr.mxu0 0.0
        %1178 = vmatpush2.msra.mxu0 0.0
        %1179 = vmatprep.subr.mxu0 0.0
        %1180 = vmatpush2.msra.mxu0 0.0
        %1181 = vmatprep.subr.mxu0 0.0
        %1182 = vmatpush2.msra.mxu0 0.0
        %1183 = vmatprep.subr.mxu0 0.0
        %1184 = vmatpush2.msra.mxu0 0.0
        %1185 = vmatprep.subr.mxu0 0.0
        %1186 = vmatpush2.msra.mxu0 0.0
        %1187 = vmatprep.subr.mxu0 0.0
        %1188 = vmatpush2.msra.mxu0 0.0
        %1189 = vmatprep.mubr.f32.mxu0 0.0
        %1190 = vmatmul.mubr.f32.gmra.mxu0 %v1123
        %v1191 = vpop.f32.mrf.mxu0
        %v1192 = vadd.f32 0.0, %v1191
        %v1193 = vpop.f32.mrf.mxu0
        %1194 = vdwg.mxu0
        %v1195 = vld [vmem:[#allocation9 + $0x10] sm:$0xff]
        %v1197 = vsel %vm555, %v1192, 0
        %1199 = vmatprep.subr.mxu0 0.0
        %1200 = vmatpush1.msra.mxu0 0.0
        %1201 = vmatprep.subr.mxu0 0.0
        %1202 = vmatpush1.msra.mxu0 0.0
        %1203 = vmatprep.subr.mxu0 0.0
        %1204 = vmatpush1.msra.mxu0 0.0
        %1205 = vmatprep.subr.mxu0 0.0
        %1206 = vmatpush1.msra.mxu0 0.0
        %1207 = vmatprep.subr.mxu0 0.0
        %1208 = vmatpush1.msra.mxu0 0.0
        %1209 = vmatprep.subr.mxu0 0.0
        %1210 = vmatpush1.msra.mxu0 0.0
        %1211 = vmatprep.subr.mxu0 0.0
        %1212 = vmatpush1.msra.mxu0 0.0
        %1213 = vmatprep.subr.mxu0 0.0
        %1214 = vmatpush1.msra.mxu0 0.0
        %1215 = vmatprep.subr.mxu0 0.0
        %1216 = vmatpush1.msra.mxu0 0.0
        %1217 = vmatprep.subr.mxu0 0.0
        %1218 = vmatpush1.msra.mxu0 0.0
        %1219 = vmatprep.subr.mxu0 0.0
        %1220 = vmatpush1.msra.mxu0 0.0
        %1221 = vmatprep.subr.mxu0 0.0
        %1222 = vmatpush1.msra.mxu0 0.0
        %1223 = vmatprep.subr.mxu0 0.0
        %1224 = vmatpush1.msra.mxu0 0.0
        %1225 = vmatprep.subr.mxu0 0.0
        %1226 = vmatpush1.msra.mxu0 0.0
        %1227 = vmatprep.subr.mxu0 0.0
        %1228 = vmatpush1.msra.mxu0 0.0
        %1229 = vmatprep.subr.mxu0 0.0
        %1230 = vmatpush1.msra.mxu0 %v1195
        %1231 = vmatprep.subr.mxu0 0.0
        %1232 = vmatpush2.msra.mxu0 0.0
        %1233 = vmatprep.subr.mxu0 0.0
        %1234 = vmatpush2.msra.mxu0 0.0
        %1235 = vmatprep.subr.mxu0 0.0
        %1236 = vmatpush2.msra.mxu0 0.0
        %1237 = vmatprep.subr.mxu0 0.0
        %1238 = vmatpush2.msra.mxu0 0.0
        %1239 = vmatprep.subr.mxu0 0.0
        %1240 = vmatpush2.msra.mxu0 0.0
        %1241 = vmatprep.subr.mxu0 0.0
        %1242 = vmatpush2.msra.mxu0 0.0
        %1243 = vmatprep.subr.mxu0 0.0
        %1244 = vmatpush2.msra.mxu0 0.0
        %1245 = vmatprep.subr.mxu0 0.0
        %1246 = vmatpush2.msra.mxu0 0.0
        %1247 = vmatprep.subr.mxu0 0.0
        %1248 = vmatpush2.msra.mxu0 0.0
        %1249 = vmatprep.subr.mxu0 0.0
        %1250 = vmatpush2.msra.mxu0 0.0
        %1251 = vmatprep.subr.mxu0 0.0
        %1252 = vmatpush2.msra.mxu0 0.0
        %1253 = vmatprep.subr.mxu0 0.0
        %1254 = vmatpush2.msra.mxu0 0.0
        %1255 = vmatprep.subr.mxu0 0.0
        %1256 = vmatpush2.msra.mxu0 0.0
        %1257 = vmatprep.subr.mxu0 0.0
        %1258 = vmatpush2.msra.mxu0 0.0
        %1259 = vmatprep.subr.mxu0 0.0
        %1260 = vmatpush2.msra.mxu0 0.0
        %1261 = vmatprep.subr.mxu0 0.0
        %1262 = vmatpush2.msra.mxu0 0.0
        %1263 = vmatprep.mubr.f32.mxu0 0.0
        %1264 = vmatmul.mubr.f32.gmra.mxu0 %v1197
        %v1265 = vpop.f32.mrf.mxu0
        %v1266 = vadd.f32 0.0, %v1265
        %v1267 = vpop.f32.mrf.mxu0
        %1268 = vdwg.mxu0
        %v1269 = vadd.f32 %v1027, %v1266
        %s1270 = scalar_lea.vmem [#allocation2], 24
        %v1271 = vld [vmem:[%s1270] sm:$0xff]
        %1272 = vrot.lane.b32.xlu0 %v553, 104
        %v1273 = vpop.permute.xlu0 %1272
        %v1274 = vsel %vm555, %v1273, 0
        %v1277 = vsel %vm555, %v1271, 0
        %1279 = vmatprep.subr.mxu0 0.0
        %1280 = vmatpush1.xpose.msra.mxu0 0.0
        %1281 = vmatprep.subr.mxu0 0.0
        %1282 = vmatpush1.xpose.msra.mxu0 0.0
        %1283 = vmatprep.subr.mxu0 0.0
        %1284 = vmatpush1.xpose.msra.mxu0 0.0
        %1285 = vmatprep.subr.mxu0 0.0
        %1286 = vmatpush1.xpose.msra.mxu0 0.0
        %1287 = vmatprep.subr.mxu0 0.0
        %1288 = vmatpush1.xpose.msra.mxu0 0.0
        %1289 = vmatprep.subr.mxu0 0.0
        %1290 = vmatpush1.xpose.msra.mxu0 0.0
        %1291 = vmatprep.subr.mxu0 0.0
        %1292 = vmatpush1.xpose.msra.mxu0 0.0
        %1293 = vmatprep.subr.mxu0 0.0
        %1294 = vmatpush1.xpose.msra.mxu0 0.0
        %1295 = vmatprep.subr.mxu0 0.0
        %1296 = vmatpush1.xpose.msra.mxu0 0.0
        %1297 = vmatprep.subr.mxu0 0.0
        %1298 = vmatpush1.xpose.msra.mxu0 0.0
        %1299 = vmatprep.subr.mxu0 0.0
        %1300 = vmatpush1.xpose.msra.mxu0 0.0
        %1301 = vmatprep.subr.mxu0 0.0
        %1302 = vmatpush1.xpose.msra.mxu0 0.0
        %1303 = vmatprep.subr.mxu0 0.0
        %1304 = vmatpush1.xpose.msra.mxu0 0.0
        %1305 = vmatprep.subr.mxu0 0.0
        %1306 = vmatpush1.xpose.msra.mxu0 0.0
        %1307 = vmatprep.subr.mxu0 0.0
        %1308 = vmatpush1.xpose.msra.mxu0 0.0
        %1309 = vmatprep.subr.mxu0 0.0
        %1310 = vmatpush1.xpose.msra.mxu0 %v1277
        %1311 = vmatprep.subr.mxu0 0.0
        %1312 = vmatpush2.xpose.msra.mxu0 0.0
        %1313 = vmatprep.subr.mxu0 0.0
        %1314 = vmatpush2.xpose.msra.mxu0 0.0
        %1315 = vmatprep.subr.mxu0 0.0
        %1316 = vmatpush2.xpose.msra.mxu0 0.0
        %1317 = vmatprep.subr.mxu0 0.0
        %1318 = vmatpush2.xpose.msra.mxu0 0.0
        %1319 = vmatprep.subr.mxu0 0.0
        %1320 = vmatpush2.xpose.msra.mxu0 0.0
        %1321 = vmatprep.subr.mxu0 0.0
        %1322 = vmatpush2.xpose.msra.mxu0 0.0
        %1323 = vmatprep.subr.mxu0 0.0
        %1324 = vmatpush2.xpose.msra.mxu0 0.0
        %1325 = vmatprep.subr.mxu0 0.0
        %1326 = vmatpush2.xpose.msra.mxu0 0.0
        %1327 = vmatprep.subr.mxu0 0.0
        %1328 = vmatpush2.xpose.msra.mxu0 0.0
        %1329 = vmatprep.subr.mxu0 0.0
        %1330 = vmatpush2.xpose.msra.mxu0 0.0
        %1331 = vmatprep.subr.mxu0 0.0
        %1332 = vmatpush2.xpose.msra.mxu0 0.0
        %1333 = vmatprep.subr.mxu0 0.0
        %1334 = vmatpush2.xpose.msra.mxu0 0.0
        %1335 = vmatprep.subr.mxu0 0.0
        %1336 = vmatpush2.xpose.msra.mxu0 0.0
        %1337 = vmatprep.subr.mxu0 0.0
        %1338 = vmatpush2.xpose.msra.mxu0 0.0
        %1339 = vmatprep.subr.mxu0 0.0
        %1340 = vmatpush2.xpose.msra.mxu0 0.0
        %1341 = vmatprep.subr.mxu0 0.0
        %1342 = vmatpush2.xpose.msra.mxu0 0.0
        %1343 = vmatprep.mubr.f32.mxu0 0.0
        %1344 = vmatmul.mubr.f32.gmra.mxu0 %v1274
        %v1345 = vpop.f32.mrf.mxu0
        %v1346 = vadd.f32 0.0, %v1345
        %v1347 = vpop.f32.mrf.mxu0
        %1348 = vdwg.mxu0
        %v1349 = vsel %vm555, %v1346, -inf
        %1350 = vmax.xlane.f32.xlu0 %v1349
        %v1351 = vpop.xlane.xlu0 %1350
        %v1352 = vsub.f32 %v1346, %v1351
        %v1353 = vmul.f32 %v1352, 1.442695
        %v1354 = vpow.pop %v1353
        %v1355 = vsel %vm555, %v1354, 0.0
        %1356 = vadd.xlane.f32.xlu0 %v1355
        %v1357 = vpop.xlane.xlu0 %1356
        %v1358 = vrcp.pop %v1357
        %v1359 = vmul.f32 %v1354, %v1358
        %s1360 = scalar_lea.vmem [#allocation3], 24
        %v1361 = vld [vmem:[%s1360] sm:$0xff]
        %v1363 = vsel %vm555, %v1359, 0
        %1365 = vmatprep.subr.mxu0 0.0
        %1366 = vmatpush1.msra.mxu0 0.0
        %1367 = vmatprep.subr.mxu0 0.0
        %1368 = vmatpush1.msra.mxu0 0.0
        %1369 = vmatprep.subr.mxu0 0.0
        %1370 = vmatpush1.msra.mxu0 0.0
        %1371 = vmatprep.subr.mxu0 0.0
        %1372 = vmatpush1.msra.mxu0 0.0
        %1373 = vmatprep.subr.mxu0 0.0
        %1374 = vmatpush1.msra.mxu0 0.0
        %1375 = vmatprep.subr.mxu0 0.0
        %1376 = vmatpush1.msra.mxu0 0.0
        %1377 = vmatprep.subr.mxu0 0.0
        %1378 = vmatpush1.msra.mxu0 0.0
        %1379 = vmatprep.subr.mxu0 0.0
        %1380 = vmatpush1.msra.mxu0 0.0
        %1381 = vmatprep.subr.mxu0 0.0
        %1382 = vmatpush1.msra.mxu0 0.0
        %1383 = vmatprep.subr.mxu0 0.0
        %1384 = vmatpush1.msra.mxu0 0.0
        %1385 = vmatprep.subr.mxu0 0.0
        %1386 = vmatpush1.msra.mxu0 0.0
        %1387 = vmatprep.subr.mxu0 0.0
        %1388 = vmatpush1.msra.mxu0 0.0
        %1389 = vmatprep.subr.mxu0 0.0
        %1390 = vmatpush1.msra.mxu0 0.0
        %1391 = vmatprep.subr.mxu0 0.0
        %1392 = vmatpush1.msra.mxu0 0.0
        %1393 = vmatprep.subr.mxu0 0.0
        %1394 = vmatpush1.msra.mxu0 0.0
        %1395 = vmatprep.subr.mxu0 0.0
        %1396 = vmatpush1.msra.mxu0 %v1361
        %1397 = vmatprep.subr.mxu0 0.0
        %1398 = vmatpush2.msra.mxu0 0.0
        %1399 = vmatprep.subr.mxu0 0.0
        %1400 = vmatpush2.msra.mxu0 0.0
        %1401 = vmatprep.subr.mxu0 0.0
        %1402 = vmatpush2.msra.mxu0 0.0
        %1403 = vmatprep.subr.mxu0 0.0
        %1404 = vmatpush2.msra.mxu0 0.0
        %1405 = vmatprep.subr.mxu0 0.0
        %1406 = vmatpush2.msra.mxu0 0.0
        %1407 = vmatprep.subr.mxu0 0.0
        %1408 = vmatpush2.msra.mxu0 0.0
        %1409 = vmatprep.subr.mxu0 0.0
        %1410 = vmatpush2.msra.mxu0 0.0
        %1411 = vmatprep.subr.mxu0 0.0
        %1412 = vmatpush2.msra.mxu0 0.0
        %1413 = vmatprep.subr.mxu0 0.0
        %1414 = vmatpush2.msra.mxu0 0.0
        %1415 = vmatprep.subr.mxu0 0.0
        %1416 = vmatpush2.msra.mxu0 0.0
        %1417 = vmatprep.subr.mxu0 0.0
        %1418 = vmatpush2.msra.mxu0 0.0
        %1419 = vmatprep.subr.mxu0 0.0
        %1420 = vmatpush2.msra.mxu0 0.0
        %1421 = vmatprep.subr.mxu0 0.0
        %1422 = vmatpush2.msra.mxu0 0.0
        %1423 = vmatprep.subr.mxu0 0.0
        %1424 = vmatpush2.msra.mxu0 0.0
        %1425 = vmatprep.subr.mxu0 0.0
        %1426 = vmatpush2.msra.mxu0 0.0
        %1427 = vmatprep.subr.mxu0 0.0
        %1428 = vmatpush2.msra.mxu0 0.0
        %1429 = vmatprep.mubr.f32.mxu0 0.0
        %1430 = vmatmul.mubr.f32.gmra.mxu0 %v1363
        %v1431 = vpop.f32.mrf.mxu0
        %v1432 = vadd.f32 0.0, %v1431
        %v1433 = vpop.f32.mrf.mxu0
        %1434 = vdwg.mxu0
        %v1435 = vld [vmem:[#allocation9 + $0x18] sm:$0xff]
        %v1437 = vsel %vm555, %v1432, 0
        %1439 = vmatprep.subr.mxu0 0.0
        %1440 = vmatpush1.msra.mxu0 0.0
        %1441 = vmatprep.subr.mxu0 0.0
        %1442 = vmatpush1.msra.mxu0 0.0
        %1443 = vmatprep.subr.mxu0 0.0
        %1444 = vmatpush1.msra.mxu0 0.0
        %1445 = vmatprep.subr.mxu0 0.0
        %1446 = vmatpush1.msra.mxu0 0.0
        %1447 = vmatprep.subr.mxu0 0.0
        %1448 = vmatpush1.msra.mxu0 0.0
        %1449 = vmatprep.subr.mxu0 0.0
        %1450 = vmatpush1.msra.mxu0 0.0
        %1451 = vmatprep.subr.mxu0 0.0
        %1452 = vmatpush1.msra.mxu0 0.0
        %1453 = vmatprep.subr.mxu0 0.0
        %1454 = vmatpush1.msra.mxu0 0.0
        %1455 = vmatprep.subr.mxu0 0.0
        %1456 = vmatpush1.msra.mxu0 0.0
        %1457 = vmatprep.subr.mxu0 0.0
        %1458 = vmatpush1.msra.mxu0 0.0
        %1459 = vmatprep.subr.mxu0 0.0
        %1460 = vmatpush1.msra.mxu0 0.0
        %1461 = vmatprep.subr.mxu0 0.0
        %1462 = vmatpush1.msra.mxu0 0.0
        %1463 = vmatprep.subr.mxu0 0.0
        %1464 = vmatpush1.msra.mxu0 0.0
        %1465 = vmatprep.subr.mxu0 0.0
        %1466 = vmatpush1.msra.mxu0 0.0
        %1467 = vmatprep.subr.mxu0 0.0
        %1468 = vmatpush1.msra.mxu0 0.0
        %1469 = vmatprep.subr.mxu0 0.0
        %1470 = vmatpush1.msra.mxu0 %v1435
        %1471 = vmatprep.subr.mxu0 0.0
        %1472 = vmatpush2.msra.mxu0 0.0
        %1473 = vmatprep.subr.mxu0 0.0
        %1474 = vmatpush2.msra.mxu0 0.0
        %1475 = vmatprep.subr.mxu0 0.0
        %1476 = vmatpush2.msra.mxu0 0.0
        %1477 = vmatprep.subr.mxu0 0.0
        %1478 = vmatpush2.msra.mxu0 0.0
        %1479 = vmatprep.subr.mxu0 0.0
        %1480 = vmatpush2.msra.mxu0 0.0
        %1481 = vmatprep.subr.mxu0 0.0
        %1482 = vmatpush2.msra.mxu0 0.0
        %1483 = vmatprep.subr.mxu0 0.0
        %1484 = vmatpush2.msra.mxu0 0.0
        %1485 = vmatprep.subr.mxu0 0.0
        %1486 = vmatpush2.msra.mxu0 0.0
        %1487 = vmatprep.subr.mxu0 0.0
        %1488 = vmatpush2.msra.mxu0 0.0
        %1489 = vmatprep.subr.mxu0 0.0
        %1490 = vmatpush2.msra.mxu0 0.0
        %1491 = vmatprep.subr.mxu0 0.0
        %1492 = vmatpush2.msra.mxu0 0.0
        %1493 = vmatprep.subr.mxu0 0.0
        %1494 = vmatpush2.msra.mxu0 0.0
        %1495 = vmatprep.subr.mxu0 0.0
        %1496 = vmatpush2.msra.mxu0 0.0
        %1497 = vmatprep.subr.mxu0 0.0
        %1498 = vmatpush2.msra.mxu0 0.0
        %1499 = vmatprep.subr.mxu0 0.0
        %1500 = vmatpush2.msra.mxu0 0.0
        %1501 = vmatprep.subr.mxu0 0.0
        %1502 = vmatpush2.msra.mxu0 0.0
        %1503 = vmatprep.mubr.f32.mxu0 0.0
        %1504 = vmatmul.mubr.f32.gmra.mxu0 %v1437
        %v1505 = vpop.f32.mrf.mxu0
        %v1506 = vadd.f32 0.0, %v1505
        %v1507 = vpop.f32.mrf.mxu0
        %1508 = vdwg.mxu0
        %v1509 = vadd.f32 %v1269, %v1506
        %v1510 = vld [vmem:[%s3] sm:$0x1]
        %v1512 = vlaneseq
        %v1513 = vshrl.u32 %v1512, 7
        %v1514 = vsub.s32 0, %v1513
        %v1515 = vrot.slane %v1510, %v1514
        %v1517 = vadd.f32 %v1509, %v1515
        %1518 = vst.msk [vmem:[%s255] sm:$0xff] %vm479, %v1517
        %s1519 = sand.u32 %s133, 1
        %s1520 = scalar_lea.sflag [#allocation6], %s1519
        %s1521 = sand.u32 %s133, 1
        %s1522 = smul.addr %s1521, 8
        %s1523 = scalar_lea.vmem [#allocation10], %s1522
        // Predicated region
        $region53: #{tpu_custom_call.1} parent=35 // pred_check
          %p1524 = pneg %p143
        $region54: #{tpu_custom_call.1} parent=35 // pred_check_branch
          %1526 = sbr.rel (%p1524) target = $region56
        $region55: #{tpu_custom_call.1} parent=35 // pred_region
          %s1528 = ssub.s32 128, 128
          %1529 = vsyncadd %s1520, %s1528
          %s1530 = sadd.s32 %s27, %s26
          %s1531 = smul.addr %s1530, 128
          %s1532 = scalar_lea.hbm %s4, %s1531
          %s1534 = sshll.u32 %s1523, 4
          %s1535 = int_to_ptr.vmem [resolvable:$true] %s1534
          %1537 = dma.vmem_to_hbm [thread:$0]  %s1535, 128, %s1532, %s1520
        $region56: #{tpu_custom_call.1} parent=35 // pred_fallthru
          _
      $region36: #{tpu_custom_call.1} parent=5 // pred_fallthru
        _
      %p1538 = scmp.le.s32.totalorder 2, %s17
      // Predicated region
      $region57: #{tpu_custom_call.1} parent=5 // pred_check
        %p1539 = pneg %p1538
      $region58: #{tpu_custom_call.1} parent=5 // pred_check_branch
        %1541 = sbr.rel (%p1539) target = $region60
      $region59: #{tpu_custom_call.1} parent=5 // pred_region
        %s1542 = ssub.s32 %s17, 2
        // Predicated region
        $region61: #{tpu_custom_call.1} parent=59 // pred_check
          %p1543 = pneg %p149
        $region62: #{tpu_custom_call.1} parent=59 // pred_check_branch
          %1545 = sbr.rel (%p1543) target = $region64
        $region63: #{tpu_custom_call.1} parent=59 // pred_region
          %s1546 = sand.u32 %s134, 1
          %s1547 = scalar_lea.sflag [#allocation6], %s1546
          %s1548 = sand.u32 %s134, 1
          %s1549 = smul.addr %s1548, 8
          %s1550 = scalar_lea.vmem [#allocation10], %s1549
          %1551 = dma.done %s1547, 128
        $region64: #{tpu_custom_call.1} parent=59 // pred_fallthru
          _
      $region60: #{tpu_custom_call.1} parent=5 // pred_fallthru
        _
    $region6: #{tpu_custom_call.1} parent=1 // loop_footer
      %s21 = sadd.s32 1, %s17
    $region7: #{tpu_custom_call.1} parent=1 // loop_footer_branch
      %16 = sbr.rel target = $region3
    $region8: #{tpu_custom_call.1} parent=1 // loop_exit
      _
    %1552 = vsyncpa [#allocation5], 1
    %s1553 = scalar_lea.sflag [#allocation5], 1
    %1554 = vsyncpa %s1553, 1
    %1555 = vsyncpa [#allocation8], 1
    %1556 = vsyncpa [#allocation6], 1
    %s1557 = scalar_lea.sflag [#allocation6], 1
    %1558 = vsyncpa %s1557, 1

</llo_original>
